<compile_context>
chip_gen: v5e
topology: v5e:2x2
jax: 0.10.0
libtpu: 0.0.40
codegen_flags: <defaults>
</compile_context>

<pallas_src>
import math
import functools

import jax
import jax.numpy as jnp
from jax.experimental import pallas as pl
from jax.experimental.pallas import tpu as pltpu

_LN_EPS = 1e-5  # torch.nn.LayerNorm default


def _layernorm(y, gamma, beta, eps):
    mu = jnp.mean(y, axis=-1, keepdims=True)
    d = y - mu
    var = jnp.mean(d * d, axis=-1, keepdims=True)
    return d * jax.lax.rsqrt(var + eps) * gamma + beta


# ----------------------------------------------------------------------------
# Kernel 1: multi-head attention + residual + LayerNorm (one batch, one q-tile)
# ----------------------------------------------------------------------------
def _mha_res_ln_kernel(q_ref, kv_ref, mask_ref,
                       wq_ref, bq_ref, wk_ref, bk_ref, wv_ref, bv_ref,
                       wo_ref, bo_ref, gamma_ref, beta_ref,
                       o_ref, *, heads, attn_dim, eps):
    x_q = q_ref[0].astype(jnp.float32)      # (Tq, E)   query rows (also residual)
    x_kv = kv_ref[0].astype(jnp.float32)    # (Skv, E)  key/value rows
    mask = mask_ref[0]                      # (Tq, Skv) 0 => masked

    inv_scale = 1.0 / math.sqrt(float(attn_dim))
    acc = jnp.zeros(o_ref.shape[1:], jnp.float32)  # (Tq, E) output-proj accumulator

    # Small static head loop (heads is small).  All per-head weight slices are
    # leading-axis slices of (H, E, D) / (H, D, E) tensors -> no lane slicing.
    for h in range(heads):
        Qh = (jnp.dot(x_q, wq_ref[h], preferred_element_type=jnp.float32)
              + bq_ref[h]) * inv_scale                                        # (Tq, D)
        Kh = jnp.dot(x_kv, wk_ref[h], preferred_element_type=jnp.float32) + bk_ref[h]
        Vh = jnp.dot(x_kv, wv_ref[h], preferred_element_type=jnp.float32) + bv_ref[h]

        # QK^T without an explicit transpose: contract the shared D axis.
        energy = jax.lax.dot_general(
            Qh, Kh, (((1,), (1,)), ((), ())),
            preferred_element_type=jnp.float32)                               # (Tq, Skv)
        energy = jnp.where(mask == 0, -1e10, energy)

        m = jnp.max(energy, axis=-1, keepdims=True)
        p = jnp.exp(energy - m)
        denom = jnp.sum(p, axis=-1, keepdims=True)
        attn = p * pl.reciprocal(denom, approx=True)                          # softmax

        ctx = jnp.dot(attn, Vh, preferred_element_type=jnp.float32)           # (Tq, D)
        # concat_h(ctx_h) @ Wo.T == sum_h ctx_h @ Wo_h,  Wo_h = (D, E)
        acc = acc + jnp.dot(ctx, wo_ref[h], preferred_element_type=jnp.float32)

    out = acc + bo_ref[...]                                                   # (Tq, E)
    y = _layernorm(x_q + out, gamma_ref[...], beta_ref[...], eps)             # residual+LN
    o_ref[0] = y.astype(o_ref.dtype)


# ----------------------------------------------------------------------------
# Kernel 2: position-wise feed-forward + residual + LayerNorm
# ----------------------------------------------------------------------------
def _ffn_res_ln_kernel(x_ref, w1_ref, b1_ref, w2_ref, b2_ref,
                       gamma_ref, beta_ref, o_ref, *, eps):
    x = x_ref[0].astype(jnp.float32)                                          # (Tq, E)
    h = jnp.dot(x, w1_ref[...], preferred_element_type=jnp.float32) + b1_ref[...]
    h = jnp.maximum(h, 0.0)                                                   # relu
    f = jnp.dot(h, w2_ref[...], preferred_element_type=jnp.float32) + b2_ref[...]
    y = _layernorm(x + f, gamma_ref[...], beta_ref[...], eps)
    o_ref[0] = y.astype(o_ref.dtype)


# ----------------------------------------------------------------------------
# Wrappers
# ----------------------------------------------------------------------------
def _q_tile(S, E):
    """Query-tile rows: keep whole S when small; 128/256-row tiles otherwise."""
    if S <= 256 or E % 128 != 0:
        return S
    for t in (256, 128, 64, 32, 16, 8):
        if S % t == 0:
            return t
    return S


def _prep_mha_params(p, heads):
    """PyTorch (out,in) Linear weights -> kernel-friendly layouts (done once)."""
    E = p["wq"].shape[0]
    D = E // heads

    def split_w(w):   # (E_out, E_in) -> (H, E_in, D);  kernel computes x @ w[h]
        return jnp.transpose(jnp.transpose(w).reshape(E, heads, D), (1, 0, 2))

    def split_b(b):   # (E,) -> (H, 1, D)
        return b.reshape(heads, 1, D)

    return {
        "wq": split_w(p["wq"]), "bq": split_b(p["bq"]),
        "wk": split_w(p["wk"]), "bk": split_b(p["bk"]),
        "wv": split_w(p["wv"]), "bv": split_b(p["bv"]),
        "wo": jnp.transpose(p["wo"]).reshape(heads, D, E),   # (H, D, E)
        "bo": p["bo"].reshape(1, E),
    }


def _mha_res_ln(q, kv, mask, mp, ln, *, heads):
    """LayerNorm(q + MHA(q, kv, kv, mask)) via one pallas_call."""
    B, Sq, E = q.shape
    Skv = kv.shape[1]
    D = E // heads
    Tq = _q_tile(Sq, E)
    kernel = functools.partial(_mha_res_ln_kernel,
                               heads=heads, attn_dim=D, eps=_LN_EPS)

    q_spec = pl.BlockSpec((1, Tq, E), lambda b, t: (b, t, 0))
    kv_spec = pl.BlockSpec((1, Skv, E), lambda b, t: (b, 0, 0))
    mask_spec = pl.BlockSpec((1, Tq, Skv), lambda b, t: (b, t, 0))
    w_spec = pl.BlockSpec((heads, E, D), lambda b, t: (0, 0, 0))
    b_spec = pl.BlockSpec((heads, 1, D), lambda b, t: (0, 0, 0))
    wo_spec = pl.BlockSpec((heads, D, E), lambda b, t: (0, 0, 0))
    vec_spec = pl.BlockSpec((1, E), lambda b, t: (0, 0))

    return pl.pallas_call(
        kernel,
        out_shape=jax.ShapeDtypeStruct((B, Sq, E), q.dtype),
        grid_spec=pltpu.PrefetchScalarGridSpec(
            num_scalar_prefetch=0,
            grid=(B, Sq // Tq),
            in_specs=[q_spec, kv_spec, mask_spec,
                      w_spec, b_spec, w_spec, b_spec, w_spec, b_spec,
                      wo_spec, vec_spec, vec_spec, vec_spec],
            out_specs=q_spec),
        compiler_params=pltpu.CompilerParams(
            dimension_semantics=("parallel", "parallel")),
    )(q, kv, mask,
      mp["wq"], mp["bq"], mp["wk"], mp["bk"], mp["wv"], mp["bv"],
      mp["wo"], mp["bo"], ln["gamma"], ln["beta"])


def _ffn_res_ln(x, fp, ln):
    """LayerNorm(x + FFN(x)) via one pallas_call."""
    B, S, E = x.shape
    P = fp["w1"].shape[1]
    T = _q_tile(S, E)
    kernel = functools.partial(_ffn_res_ln_kernel, eps=_LN_EPS)
    x_spec = pl.BlockSpec((1, T, E), lambda b, t: (b, t, 0))

    return pl.pallas_call(
        kernel,
        out_shape=jax.ShapeDtypeStruct((B, S, E), x.dtype),
        grid_spec=pltpu.PrefetchScalarGridSpec(
            num_scalar_prefetch=0,
            grid=(B, S // T),
            in_specs=[x_spec,
                      pl.BlockSpec((E, P), lambda b, t: (0, 0)),
                      pl.BlockSpec((1, P), lambda b, t: (0, 0)),
                      pl.BlockSpec((P, E), lambda b, t: (0, 0)),
                      pl.BlockSpec((1, E), lambda b, t: (0, 0)),
                      pl.BlockSpec((1, E), lambda b, t: (0, 0)),
                      pl.BlockSpec((1, E), lambda b, t: (0, 0))],
            out_specs=x_spec),
        compiler_params=pltpu.CompilerParams(
            dimension_semantics=("parallel", "parallel")),
    )(x, fp["w1"], fp["b1"], fp["w2"], fp["b2"], ln["gamma"], ln["beta"])


def decoder_layer(embed_trg, embed_src, trg_mask, src_mask, params, *, heads):
    """Pallas forward of DecoderLayer (eval mode: all dropout = identity)."""
    B, St, E = embed_trg.shape
    Ss = embed_src.shape[1]
    if trg_mask is None:
        trg_mask = jnp.ones((B, St, St), jnp.float32)
    if src_mask is None:
        src_mask = jnp.ones((B, St, Ss), jnp.float32)

    sa = _prep_mha_params(params["self_attn"], heads)
    ca = _prep_mha_params(params["src_attn"], heads)
    ln = {"gamma": params["ln_gamma"].reshape(1, E),
          "beta": params["ln_beta"].reshape(1, E)}
    ff = {"w1": jnp.transpose(params["pos_ff"]["w1"]),   # (E, P)
          "b1": params["pos_ff"]["b1"].reshape(1, -1),
          "w2": jnp.transpose(params["pos_ff"]["w2"]),   # (P, E)
          "b2": params["pos_ff"]["b2"].reshape(1, E)}

    x = _mha_res_ln(embed_trg, embed_trg, trg_mask, sa, ln, heads=heads)
    x = _mha_res_ln(x, embed_src, src_mask, ca, ln, heads=heads)
    x = _ffn_res_ln(x, ff, ln)
    return x


# ----------------------------------------------------------------------------
# Pure-JAX reference mirroring the PyTorch forward (eval mode)
# ----------------------------------------------------------------------------
def _reference(embed_trg, embed_src, trg_mask, src_mask, params, *, heads):
    def lin(x, w, b):
        return x @ w.T + b

    def mha(q, k, v, mask, p):
        B, Sq, E = q.shape
        D = E // heads
        Q = lin(q, p["wq"], p["bq"]).reshape(B, Sq, heads, D).transpose(0, 2, 1, 3)
        K = lin(k, p["wk"], p["bk"]).reshape(B, -1, heads, D).transpose(0, 2, 1, 3)
        V = lin(v, p["wv"], p["bv"]).reshape(B, -1, heads, D).transpose(0, 2, 1, 3)
        energy = jnp.einsum("bhqd,bhkd->bhqk", Q, K) / jnp.sqrt(jnp.float32(D))
        energy = jnp.where(mask[:, None, :, :] == 0, -1e10, energy)
        attn = jax.nn.softmax(energy, axis=-1)
        x = jnp.einsum("bhqk,bhkd->bhqd", attn, V)
        x = x.transpose(0, 2, 1, 3).reshape(B, Sq, E)
        return lin(x, p["wo"], p["bo"])

    def ln(x):
        g, b = params["ln_gamma"], params["ln_beta"]
        mu = x.mean(-1, keepdims=True)
        var = ((x - mu) ** 2).mean(-1, keepdims=True)
        return (x - mu) / jnp.sqrt(var + _LN_EPS) * g + b

    def ffn(x):
        p = params["pos_ff"]
        h = jax.nn.relu(x @ p["w1"].T + p["b1"])
        return h @ p["w2"].T + p["b2"]

    x = ln(embed_trg + mha(embed_trg, embed_trg, embed_trg, trg_mask, params["self_attn"]))
    x = ln(x + mha(x, embed_src, embed_src, src_mask, params["src_attn"]))
    x = ln(x + ffn(x))
    return x


if __name__ == "__main__":
    B, S_TRG, S_SRC, E, H, PF = 2, 16, 24, 128, 4, 256   # attn_dim = 32, E lane-dense
    key0 = jax.random.PRNGKey(0)
    kit = iter(jax.random.split(key0, 32))

    def linear(out_f, in_f):
        bound = 1.0 / math.sqrt(in_f)
        w = jax.random.uniform(next(kit), (out_f, in_f), jnp.float32, -bound, bound)
        b = jax.random.uniform(next(kit), (out_f,), jnp.float32, -bound, bound)
        return w, b

    def mha_params():
        wq, bq = linear(E, E)
        wk, bk = linear(E, E)
        wv, bv = linear(E, E)
        wo, bo = linear(E, E)
        return {"wq": wq, "bq": bq, "wk": wk, "bk": bk,
                "wv": wv, "bv": bv, "wo": wo, "bo": bo}

    self_attn = mha_params()
    src_attn = mha_params()
    w1, b1 = linear(PF, E)
    w2, b2 = linear(E, PF)
    params = {
        "self_attn": self_attn,
        "src_attn": src_attn,
        "pos_ff": {"w1": w1, "b1": b1, "w2": w2, "b2": b2},
        "ln_gamma": jnp.ones((E,), jnp.float32),   # nn.LayerNorm default init
        "ln_beta": jnp.zeros((E,), jnp.float32),
    }

    embed_trg = jax.random.normal(next(kit), (B, S_TRG, E), jnp.float32)
    embed_src = jax.random.normal(next(kit), (B, S_SRC, E), jnp.float32)

    # causal target mask; padded-source mask (0 => masked, per masked_fill(mask==0))
    trg_mask = jnp.broadcast_to(
        jnp.tril(jnp.ones((S_TRG, S_TRG), jnp.float32)), (B, S_TRG, S_TRG))
    src_len = jnp.array([S_SRC, S_SRC - 5])
    src_mask = (jnp.arange(S_SRC)[None, None, :] < src_len[:, None, None]).astype(jnp.float32)
    src_mask = jnp.broadcast_to(src_mask, (B, S_TRG, S_SRC))

    out = decoder_layer(embed_trg, embed_src, trg_mask, src_mask, params, heads=H)
    out = jax.block_until_ready(out)

    ref = _reference(embed_trg, embed_src, trg_mask, src_mask, params, heads=H)
    assert out.shape == (B, S_TRG, E)
    max_err = jnp.max(jnp.abs(out - ref))
    assert jnp.allclose(out, ref, atol=1e-2, rtol=1e-2), f"mismatch vs reference (max |err| = {max_err})"

    print("KERNEL_OK")
</pallas_src>

<mosaic_0001>
module attributes {stable_mosaic.version = 11 : i64} {
  func.func @_mha_res_ln_kernel(%arg0: i32, %arg1: i32, %arg2: memref<1x16x128xf32, #tpu.memory_space<vmem>>, %arg3: memref<1x16x128xf32, #tpu.memory_space<vmem>>, %arg4: memref<1x16x16xf32, #tpu.memory_space<vmem>>, %arg5: memref<4x128x32xf32, #tpu.memory_space<vmem>>, %arg6: memref<4x1x32xf32, #tpu.memory_space<vmem>>, %arg7: memref<4x128x32xf32, #tpu.memory_space<vmem>>, %arg8: memref<4x1x32xf32, #tpu.memory_space<vmem>>, %arg9: memref<4x128x32xf32, #tpu.memory_space<vmem>>, %arg10: memref<4x1x32xf32, #tpu.memory_space<vmem>>, %arg11: memref<4x32x128xf32, #tpu.memory_space<vmem>>, %arg12: memref<1x128xf32, #tpu.memory_space<vmem>>, %arg13: memref<1x128xf32, #tpu.memory_space<vmem>>, %arg14: memref<1x128xf32, #tpu.memory_space<vmem>>, %arg15: memref<1x16x128xf32, #tpu.memory_space<vmem>>) attributes {dimension_semantics = [#tpu.dimension_semantics<parallel>, #tpu.dimension_semantics<parallel>], iteration_bounds = array<i64: 2, 1>, scalar_prefetch = 0 : i64, scratch_operands = 0 : i64, tpu.core_type = #tpu.core_type<tc>, window_params = [{transform_indices = @transform_0, window_bounds = array<i64: 1, 16, 128>}, {transform_indices = @transform_1, window_bounds = array<i64: 1, 16, 128>}, {transform_indices = @transform_2, window_bounds = array<i64: 1, 16, 16>}, {pipeline_mode = #tpu.pipeline_mode<synchronous>, transform_indices = @transform_3, window_bounds = array<i64: 4, 128, 32>}, {pipeline_mode = #tpu.pipeline_mode<synchronous>, transform_indices = @transform_4, window_bounds = array<i64: 4, 1, 32>}, {pipeline_mode = #tpu.pipeline_mode<synchronous>, transform_indices = @transform_5, window_bounds = array<i64: 4, 128, 32>}, {pipeline_mode = #tpu.pipeline_mode<synchronous>, transform_indices = @transform_6, window_bounds = array<i64: 4, 1, 32>}, {pipeline_mode = #tpu.pipeline_mode<synchronous>, transform_indices = @transform_7, window_bounds = array<i64: 4, 128, 32>}, {pipeline_mode = #tpu.pipeline_mode<synchronous>, transform_indices = @transform_8, window_bounds = array<i64: 4, 1, 32>}, {pipeline_mode = #tpu.pipeline_mode<synchronous>, transform_indices = @transform_9, window_bounds = array<i64: 4, 32, 128>}, {pipeline_mode = #tpu.pipeline_mode<synchronous>, transform_indices = @transform_10, window_bounds = array<i64: 1, 128>}, {pipeline_mode = #tpu.pipeline_mode<synchronous>, transform_indices = @transform_11, window_bounds = array<i64: 1, 128>}, {pipeline_mode = #tpu.pipeline_mode<synchronous>, transform_indices = @transform_12, window_bounds = array<i64: 1, 128>}, {transform_indices = @transform_13, window_bounds = array<i64: 1, 16, 128>}]} {
    %c0 = arith.constant 0 : index
    %c0_0 = arith.constant 0 : index
    %c0_1 = arith.constant 0 : index
    %0 = vector.load %arg2[%c0, %c0_0, %c0_1] : memref<1x16x128xf32, #tpu.memory_space<vmem>>, vector<1x16x128xf32>
    %1 = vector.shape_cast %0 : vector<1x16x128xf32> to vector<16x128xf32>
    %c0_2 = arith.constant 0 : index
    %c0_3 = arith.constant 0 : index
    %c0_4 = arith.constant 0 : index
    %2 = vector.load %arg3[%c0_2, %c0_3, %c0_4] : memref<1x16x128xf32, #tpu.memory_space<vmem>>, vector<1x16x128xf32>
    %3 = vector.shape_cast %2 : vector<1x16x128xf32> to vector<16x128xf32>
    %c0_5 = arith.constant 0 : index
    %c0_6 = arith.constant 0 : index
    %c0_7 = arith.constant 0 : index
    %4 = vector.load %arg4[%c0_5, %c0_6, %c0_7] : memref<1x16x16xf32, #tpu.memory_space<vmem>>, vector<1x16x16xf32>
    %5 = vector.shape_cast %4 : vector<1x16x16xf32> to vector<16x16xf32>
    %cst = arith.constant 0.000000e+00 : f32
    %6 = vector.broadcast %cst : f32 to vector<16x128xf32>
    %c0_8 = arith.constant 0 : index
    %c0_9 = arith.constant 0 : index
    %c0_10 = arith.constant 0 : index
    %7 = vector.load %arg5[%c0_8, %c0_9, %c0_10] : memref<4x128x32xf32, #tpu.memory_space<vmem>>, vector<1x128x32xf32>
    %8 = vector.shape_cast %7 : vector<1x128x32xf32> to vector<128x32xf32>
    %cst_11 = arith.constant dense<0.000000e+00> : vector<16x32xf32>
    %9 = tpu.matmul %1, %8, %cst_11 {dimension_numbers = #tpu.dot_dimension_numbers<[1], [0], [0], [1], [0, 0, 1, 1], [], []>} : vector<16x128xf32>, vector<128x32xf32>, vector<16x32xf32> -> vector<16x32xf32>
    %c0_12 = arith.constant 0 : index
    %c0_13 = arith.constant 0 : index
    %c0_14 = arith.constant 0 : index
    %10 = vector.load %arg6[%c0_12, %c0_13, %c0_14] : memref<4x1x32xf32, #tpu.memory_space<vmem>>, vector<1x1x32xf32>
    %11 = vector.shape_cast %10 : vector<1x1x32xf32> to vector<1x32xf32>
    %12 = vector.broadcast %11 : vector<1x32xf32> to vector<16x32xf32>
    %13 = arith.addf %9, %12 : vector<16x32xf32>
    %cst_15 = arith.constant 0.176776692 : f32
    %14 = vector.broadcast %cst_15 : f32 to vector<16x32xf32>
    %15 = arith.mulf %13, %14 : vector<16x32xf32>
    %c0_16 = arith.constant 0 : index
    %c0_17 = arith.constant 0 : index
    %c0_18 = arith.constant 0 : index
    %16 = vector.load %arg7[%c0_16, %c0_17, %c0_18] : memref<4x128x32xf32, #tpu.memory_space<vmem>>, vector<1x128x32xf32>
    %17 = vector.shape_cast %16 : vector<1x128x32xf32> to vector<128x32xf32>
    %cst_19 = arith.constant dense<0.000000e+00> : vector<16x32xf32>
    %18 = tpu.matmul %3, %17, %cst_19 {dimension_numbers = #tpu.dot_dimension_numbers<[1], [0], [0], [1], [0, 0, 1, 1], [], []>} : vector<16x128xf32>, vector<128x32xf32>, vector<16x32xf32> -> vector<16x32xf32>
    %c0_20 = arith.constant 0 : index
    %c0_21 = arith.constant 0 : index
    %c0_22 = arith.constant 0 : index
    %19 = vector.load %arg8[%c0_20, %c0_21, %c0_22] : memref<4x1x32xf32, #tpu.memory_space<vmem>>, vector<1x1x32xf32>
    %20 = vector.shape_cast %19 : vector<1x1x32xf32> to vector<1x32xf32>
    %21 = vector.broadcast %20 : vector<1x32xf32> to vector<16x32xf32>
    %22 = arith.addf %18, %21 : vector<16x32xf32>
    %c0_23 = arith.constant 0 : index
    %c0_24 = arith.constant 0 : index
    %c0_25 = arith.constant 0 : index
    %23 = vector.load %arg9[%c0_23, %c0_24, %c0_25] : memref<4x128x32xf32, #tpu.memory_space<vmem>>, vector<1x128x32xf32>
    %24 = vector.shape_cast %23 : vector<1x128x32xf32> to vector<128x32xf32>
    %cst_26 = arith.constant dense<0.000000e+00> : vector<16x32xf32>
    %25 = tpu.matmul %3, %24, %cst_26 {dimension_numbers = #tpu.dot_dimension_numbers<[1], [0], [0], [1], [0, 0, 1, 1], [], []>} : vector<16x128xf32>, vector<128x32xf32>, vector<16x32xf32> -> vector<16x32xf32>
    %c0_27 = arith.constant 0 : index
    %c0_28 = arith.constant 0 : index
    %c0_29 = arith.constant 0 : index
    %26 = vector.load %arg10[%c0_27, %c0_28, %c0_29] : memref<4x1x32xf32, #tpu.memory_space<vmem>>, vector<1x1x32xf32>
    %27 = vector.shape_cast %26 : vector<1x1x32xf32> to vector<1x32xf32>
    %28 = vector.broadcast %27 : vector<1x32xf32> to vector<16x32xf32>
    %29 = arith.addf %25, %28 : vector<16x32xf32>
    %cst_30 = arith.constant dense<0.000000e+00> : vector<16x16xf32>
    %30 = tpu.matmul %15, %22, %cst_30 {dimension_numbers = #tpu.dot_dimension_numbers<[1], [1], [0], [0], [0, 0, 1, 0], [], []>} : vector<16x32xf32>, vector<16x32xf32>, vector<16x16xf32> -> vector<16x16xf32>
    %cst_31 = arith.constant 0.000000e+00 : f32
    %31 = vector.broadcast %cst_31 : f32 to vector<16x16xf32>
    %32 = arith.cmpf oeq, %5, %31 : vector<16x16xf32>
    %cst_32 = arith.constant -1.000000e+10 : f32
    %33 = vector.broadcast %cst_32 : f32 to vector<16x16xf32>
    %34 = arith.select %32, %33, %30 : vector<16x16xi1>, vector<16x16xf32>
    %cst_33 = arith.constant dense<0xFF800000> : vector<16xf32>
    %35 = vector.multi_reduction <maximumf>, %34, %cst_33 [1] : vector<16x16xf32> to vector<16xf32>
    %36 = vector.shape_cast %35 : vector<16xf32> to vector<16x1xf32>
    %37 = vector.broadcast %36 : vector<16x1xf32> to vector<16x16xf32>
    %38 = arith.subf %34, %37 : vector<16x16xf32>
    %39 = math.exp %38 : vector<16x16xf32>
    %cst_34 = arith.constant dense<0.000000e+00> : vector<16xf32>
    %40 = vector.multi_reduction <add>, %39, %cst_34 [1] : vector<16x16xf32> to vector<16xf32>
    %41 = vector.shape_cast %40 : vector<16xf32> to vector<16x1xf32>
    %42 = tpu.reciprocal %41 {approx = true} : vector<16x1xf32> -> vector<16x1xf32>
    %43 = vector.broadcast %42 : vector<16x1xf32> to vector<16x16xf32>
    %44 = arith.mulf %39, %43 : vector<16x16xf32>
    %cst_35 = arith.constant dense<0.000000e+00> : vector<16x32xf32>
    %45 = tpu.matmul %44, %29, %cst_35 {dimension_numbers = #tpu.dot_dimension_numbers<[1], [0], [0], [1], [0, 0, 1, 1], [], []>} : vector<16x16xf32>, vector<16x32xf32>, vector<16x32xf32> -> vector<16x32xf32>
    %c0_36 = arith.constant 0 : index
    %c0_37 = arith.constant 0 : index
    %c0_38 = arith.constant 0 : index
    %46 = vector.load %arg11[%c0_36, %c0_37, %c0_38] : memref<4x32x128xf32, #tpu.memory_space<vmem>>, vector<1x32x128xf32>
    %47 = vector.shape_cast %46 : vector<1x32x128xf32> to vector<32x128xf32>
    %cst_39 = arith.constant dense<0.000000e+00> : vector<16x128xf32>
    %48 = tpu.matmul %45, %47, %cst_39 {dimension_numbers = #tpu.dot_dimension_numbers<[1], [0], [0], [1], [0, 0, 1, 1], [], []>} : vector<16x32xf32>, vector<32x128xf32>, vector<16x128xf32> -> vector<16x128xf32>
    %49 = arith.addf %6, %48 : vector<16x128xf32>
    %c1 = arith.constant 1 : index
    %c0_40 = arith.constant 0 : index
    %c0_41 = arith.constant 0 : index
    %50 = vector.load %arg5[%c1, %c0_40, %c0_41] : memref<4x128x32xf32, #tpu.memory_space<vmem>>, vector<1x128x32xf32>
    %51 = vector.shape_cast %50 : vector<1x128x32xf32> to vector<128x32xf32>
    %cst_42 = arith.constant dense<0.000000e+00> : vector<16x32xf32>
    %52 = tpu.matmul %1, %51, %cst_42 {dimension_numbers = #tpu.dot_dimension_numbers<[1], [0], [0], [1], [0, 0, 1, 1], [], []>} : vector<16x128xf32>, vector<128x32xf32>, vector<16x32xf32> -> vector<16x32xf32>
    %c1_43 = arith.constant 1 : index
    %c0_44 = arith.constant 0 : index
    %c0_45 = arith.constant 0 : index
    %53 = vector.load %arg6[%c1_43, %c0_44, %c0_45] : memref<4x1x32xf32, #tpu.memory_space<vmem>>, vector<1x1x32xf32>
    %54 = vector.shape_cast %53 : vector<1x1x32xf32> to vector<1x32xf32>
    %55 = vector.broadcast %54 : vector<1x32xf32> to vector<16x32xf32>
    %56 = arith.addf %52, %55 : vector<16x32xf32>
    %cst_46 = arith.constant 0.176776692 : f32
    %57 = vector.broadcast %cst_46 : f32 to vector<16x32xf32>
    %58 = arith.mulf %56, %57 : vector<16x32xf32>
    %c1_47 = arith.constant 1 : index
    %c0_48 = arith.constant 0 : index
    %c0_49 = arith.constant 0 : index
    %59 = vector.load %arg7[%c1_47, %c0_48, %c0_49] : memref<4x128x32xf32, #tpu.memory_space<vmem>>, vector<1x128x32xf32>
    %60 = vector.shape_cast %59 : vector<1x128x32xf32> to vector<128x32xf32>
    %cst_50 = arith.constant dense<0.000000e+00> : vector<16x32xf32>
    %61 = tpu.matmul %3, %60, %cst_50 {dimension_numbers = #tpu.dot_dimension_numbers<[1], [0], [0], [1], [0, 0, 1, 1], [], []>} : vector<16x128xf32>, vector<128x32xf32>, vector<16x32xf32> -> vector<16x32xf32>
    %c1_51 = arith.constant 1 : index
    %c0_52 = arith.constant 0 : index
    %c0_53 = arith.constant 0 : index
    %62 = vector.load %arg8[%c1_51, %c0_52, %c0_53] : memref<4x1x32xf32, #tpu.memory_space<vmem>>, vector<1x1x32xf32>
    %63 = vector.shape_cast %62 : vector<1x1x32xf32> to vector<1x32xf32>
    %64 = vector.broadcast %63 : vector<1x32xf32> to vector<16x32xf32>
    %65 = arith.addf %61, %64 : vector<16x32xf32>
    %c1_54 = arith.constant 1 : index
    %c0_55 = arith.constant 0 : index
    %c0_56 = arith.constant 0 : index
    %66 = vector.load %arg9[%c1_54, %c0_55, %c0_56] : memref<4x128x32xf32, #tpu.memory_space<vmem>>, vector<1x128x32xf32>
    %67 = vector.shape_cast %66 : vector<1x128x32xf32> to vector<128x32xf32>
    %cst_57 = arith.constant dense<0.000000e+00> : vector<16x32xf32>
    %68 = tpu.matmul %3, %67, %cst_57 {dimension_numbers = #tpu.dot_dimension_numbers<[1], [0], [0], [1], [0, 0, 1, 1], [], []>} : vector<16x128xf32>, vector<128x32xf32>, vector<16x32xf32> -> vector<16x32xf32>
    %c1_58 = arith.constant 1 : index
    %c0_59 = arith.constant 0 : index
    %c0_60 = arith.constant 0 : index
    %69 = vector.load %arg10[%c1_58, %c0_59, %c0_60] : memref<4x1x32xf32, #tpu.memory_space<vmem>>, vector<1x1x32xf32>
    %70 = vector.shape_cast %69 : vector<1x1x32xf32> to vector<1x32xf32>
    %71 = vector.broadcast %70 : vector<1x32xf32> to vector<16x32xf32>
    %72 = arith.addf %68, %71 : vector<16x32xf32>
    %cst_61 = arith.constant dense<0.000000e+00> : vector<16x16xf32>
    %73 = tpu.matmul %58, %65, %cst_61 {dimension_numbers = #tpu.dot_dimension_numbers<[1], [1], [0], [0], [0, 0, 1, 0], [], []>} : vector<16x32xf32>, vector<16x32xf32>, vector<16x16xf32> -> vector<16x16xf32>
    %cst_62 = arith.constant 0.000000e+00 : f32
    %74 = vector.broadcast %cst_62 : f32 to vector<16x16xf32>
    %75 = arith.cmpf oeq, %5, %74 : vector<16x16xf32>
    %cst_63 = arith.constant -1.000000e+10 : f32
    %76 = vector.broadcast %cst_63 : f32 to vector<16x16xf32>
    %77 = arith.select %75, %76, %73 : vector<16x16xi1>, vector<16x16xf32>
    %cst_64 = arith.constant dense<0xFF800000> : vector<16xf32>
    %78 = vector.multi_reduction <maximumf>, %77, %cst_64 [1] : vector<16x16xf32> to vector<16xf32>
    %79 = vector.shape_cast %78 : vector<16xf32> to vector<16x1xf32>
    %80 = vector.broadcast %79 : vector<16x1xf32> to vector<16x16xf32>
    %81 = arith.subf %77, %80 : vector<16x16xf32>
    %82 = math.exp %81 : vector<16x16xf32>
    %cst_65 = arith.constant dense<0.000000e+00> : vector<16xf32>
    %83 = vector.multi_reduction <add>, %82, %cst_65 [1] : vector<16x16xf32> to vector<16xf32>
    %84 = vector.shape_cast %83 : vector<16xf32> to vector<16x1xf32>
    %85 = tpu.reciprocal %84 {approx = true} : vector<16x1xf32> -> vector<16x1xf32>
    %86 = vector.broadcast %85 : vector<16x1xf32> to vector<16x16xf32>
    %87 = arith.mulf %82, %86 : vector<16x16xf32>
    %cst_66 = arith.constant dense<0.000000e+00> : vector<16x32xf32>
    %88 = tpu.matmul %87, %72, %cst_66 {dimension_numbers = #tpu.dot_dimension_numbers<[1], [0], [0], [1], [0, 0, 1, 1], [], []>} : vector<16x16xf32>, vector<16x32xf32>, vector<16x32xf32> -> vector<16x32xf32>
    %c1_67 = arith.constant 1 : index
    %c0_68 = arith.constant 0 : index
    %c0_69 = arith.constant 0 : index
    %89 = vector.load %arg11[%c1_67, %c0_68, %c0_69] : memref<4x32x128xf32, #tpu.memory_space<vmem>>, vector<1x32x128xf32>
    %90 = vector.shape_cast %89 : vector<1x32x128xf32> to vector<32x128xf32>
    %cst_70 = arith.constant dense<0.000000e+00> : vector<16x128xf32>
    %91 = tpu.matmul %88, %90, %cst_70 {dimension_numbers = #tpu.dot_dimension_numbers<[1], [0], [0], [1], [0, 0, 1, 1], [], []>} : vector<16x32xf32>, vector<32x128xf32>, vector<16x128xf32> -> vector<16x128xf32>
    %92 = arith.addf %49, %91 : vector<16x128xf32>
    %c2 = arith.constant 2 : index
    %c0_71 = arith.constant 0 : index
    %c0_72 = arith.constant 0 : index
    %93 = vector.load %arg5[%c2, %c0_71, %c0_72] : memref<4x128x32xf32, #tpu.memory_space<vmem>>, vector<1x128x32xf32>
    %94 = vector.shape_cast %93 : vector<1x128x32xf32> to vector<128x32xf32>
    %cst_73 = arith.constant dense<0.000000e+00> : vector<16x32xf32>
    %95 = tpu.matmul %1, %94, %cst_73 {dimension_numbers = #tpu.dot_dimension_numbers<[1], [0], [0], [1], [0, 0, 1, 1], [], []>} : vector<16x128xf32>, vector<128x32xf32>, vector<16x32xf32> -> vector<16x32xf32>
    %c2_74 = arith.constant 2 : index
    %c0_75 = arith.constant 0 : index
    %c0_76 = arith.constant 0 : index
    %96 = vector.load %arg6[%c2_74, %c0_75, %c0_76] : memref<4x1x32xf32, #tpu.memory_space<vmem>>, vector<1x1x32xf32>
    %97 = vector.shape_cast %96 : vector<1x1x32xf32> to vector<1x32xf32>
    %98 = vector.broadcast %97 : vector<1x32xf32> to vector<16x32xf32>
    %99 = arith.addf %95, %98 : vector<16x32xf32>
    %cst_77 = arith.constant 0.176776692 : f32
    %100 = vector.broadcast %cst_77 : f32 to vector<16x32xf32>
    %101 = arith.mulf %99, %100 : vector<16x32xf32>
    %c2_78 = arith.constant 2 : index
    %c0_79 = arith.constant 0 : index
    %c0_80 = arith.constant 0 : index
    %102 = vector.load %arg7[%c2_78, %c0_79, %c0_80] : memref<4x128x32xf32, #tpu.memory_space<vmem>>, vector<1x128x32xf32>
    %103 = vector.shape_cast %102 : vector<1x128x32xf32> to vector<128x32xf32>
    %cst_81 = arith.constant dense<0.000000e+00> : vector<16x32xf32>
    %104 = tpu.matmul %3, %103, %cst_81 {dimension_numbers = #tpu.dot_dimension_numbers<[1], [0], [0], [1], [0, 0, 1, 1], [], []>} : vector<16x128xf32>, vector<128x32xf32>, vector<16x32xf32> -> vector<16x32xf32>
    %c2_82 = arith.constant 2 : index
    %c0_83 = arith.constant 0 : index
    %c0_84 = arith.constant 0 : index
    %105 = vector.load %arg8[%c2_82, %c0_83, %c0_84] : memref<4x1x32xf32, #tpu.memory_space<vmem>>, vector<1x1x32xf32>
    %106 = vector.shape_cast %105 : vector<1x1x32xf32> to vector<1x32xf32>
    %107 = vector.broadcast %106 : vector<1x32xf32> to vector<16x32xf32>
    %108 = arith.addf %104, %107 : vector<16x32xf32>
    %c2_85 = arith.constant 2 : index
    %c0_86 = arith.constant 0 : index
    %c0_87 = arith.constant 0 : index
    %109 = vector.load %arg9[%c2_85, %c0_86, %c0_87] : memref<4x128x32xf32, #tpu.memory_space<vmem>>, vector<1x128x32xf32>
    %110 = vector.shape_cast %109 : vector<1x128x32xf32> to vector<128x32xf32>
    %cst_88 = arith.constant dense<0.000000e+00> : vector<16x32xf32>
    %111 = tpu.matmul %3, %110, %cst_88 {dimension_numbers = #tpu.dot_dimension_numbers<[1], [0], [0], [1], [0, 0, 1, 1], [], []>} : vector<16x128xf32>, vector<128x32xf32>, vector<16x32xf32> -> vector<16x32xf32>
    %c2_89 = arith.constant 2 : index
    %c0_90 = arith.constant 0 : index
    %c0_91 = arith.constant 0 : index
    %112 = vector.load %arg10[%c2_89, %c0_90, %c0_91] : memref<4x1x32xf32, #tpu.memory_space<vmem>>, vector<1x1x32xf32>
    %113 = vector.shape_cast %112 : vector<1x1x32xf32> to vector<1x32xf32>
    %114 = vector.broadcast %113 : vector<1x32xf32> to vector<16x32xf32>
    %115 = arith.addf %111, %114 : vector<16x32xf32>
    %cst_92 = arith.constant dense<0.000000e+00> : vector<16x16xf32>
    %116 = tpu.matmul %101, %108, %cst_92 {dimension_numbers = #tpu.dot_dimension_numbers<[1], [1], [0], [0], [0, 0, 1, 0], [], []>} : vector<16x32xf32>, vector<16x32xf32>, vector<16x16xf32> -> vector<16x16xf32>
    %cst_93 = arith.constant 0.000000e+00 : f32
    %117 = vector.broadcast %cst_93 : f32 to vector<16x16xf32>
    %118 = arith.cmpf oeq, %5, %117 : vector<16x16xf32>
    %cst_94 = arith.constant -1.000000e+10 : f32
    %119 = vector.broadcast %cst_94 : f32 to vector<16x16xf32>
    %120 = arith.select %118, %119, %116 : vector<16x16xi1>, vector<16x16xf32>
    %cst_95 = arith.constant dense<0xFF800000> : vector<16xf32>
    %121 = vector.multi_reduction <maximumf>, %120, %cst_95 [1] : vector<16x16xf32> to vector<16xf32>
    %122 = vector.shape_cast %121 : vector<16xf32> to vector<16x1xf32>
    %123 = vector.broadcast %122 : vector<16x1xf32> to vector<16x16xf32>
    %124 = arith.subf %120, %123 : vector<16x16xf32>
    %125 = math.exp %124 : vector<16x16xf32>
    %cst_96 = arith.constant dense<0.000000e+00> : vector<16xf32>
    %126 = vector.multi_reduction <add>, %125, %cst_96 [1] : vector<16x16xf32> to vector<16xf32>
    %127 = vector.shape_cast %126 : vector<16xf32> to vector<16x1xf32>
    %128 = tpu.reciprocal %127 {approx = true} : vector<16x1xf32> -> vector<16x1xf32>
    %129 = vector.broadcast %128 : vector<16x1xf32> to vector<16x16xf32>
    %130 = arith.mulf %125, %129 : vector<16x16xf32>
    %cst_97 = arith.constant dense<0.000000e+00> : vector<16x32xf32>
    %131 = tpu.matmul %130, %115, %cst_97 {dimension_numbers = #tpu.dot_dimension_numbers<[1], [0], [0], [1], [0, 0, 1, 1], [], []>} : vector<16x16xf32>, vector<16x32xf32>, vector<16x32xf32> -> vector<16x32xf32>
    %c2_98 = arith.constant 2 : index
    %c0_99 = arith.constant 0 : index
    %c0_100 = arith.constant 0 : index
    %132 = vector.load %arg11[%c2_98, %c0_99, %c0_100] : memref<4x32x128xf32, #tpu.memory_space<vmem>>, vector<1x32x128xf32>
    %133 = vector.shape_cast %132 : vector<1x32x128xf32> to vector<32x128xf32>
    %cst_101 = arith.constant dense<0.000000e+00> : vector<16x128xf32>
    %134 = tpu.matmul %131, %133, %cst_101 {dimension_numbers = #tpu.dot_dimension_numbers<[1], [0], [0], [1], [0, 0, 1, 1], [], []>} : vector<16x32xf32>, vector<32x128xf32>, vector<16x128xf32> -> vector<16x128xf32>
    %135 = arith.addf %92, %134 : vector<16x128xf32>
    %c3 = arith.constant 3 : index
    %c0_102 = arith.constant 0 : index
    %c0_103 = arith.constant 0 : index
    %136 = vector.load %arg5[%c3, %c0_102, %c0_103] : memref<4x128x32xf32, #tpu.memory_space<vmem>>, vector<1x128x32xf32>
    %137 = vector.shape_cast %136 : vector<1x128x32xf32> to vector<128x32xf32>
    %cst_104 = arith.constant dense<0.000000e+00> : vector<16x32xf32>
    %138 = tpu.matmul %1, %137, %cst_104 {dimension_numbers = #tpu.dot_dimension_numbers<[1], [0], [0], [1], [0, 0, 1, 1], [], []>} : vector<16x128xf32>, vector<128x32xf32>, vector<16x32xf32> -> vector<16x32xf32>
    %c3_105 = arith.constant 3 : index
    %c0_106 = arith.constant 0 : index
    %c0_107 = arith.constant 0 : index
    %139 = vector.load %arg6[%c3_105, %c0_106, %c0_107] : memref<4x1x32xf32, #tpu.memory_space<vmem>>, vector<1x1x32xf32>
    %140 = vector.shape_cast %139 : vector<1x1x32xf32> to vector<1x32xf32>
    %141 = vector.broadcast %140 : vector<1x32xf32> to vector<16x32xf32>
    %142 = arith.addf %138, %141 : vector<16x32xf32>
    %cst_108 = arith.constant 0.176776692 : f32
    %143 = vector.broadcast %cst_108 : f32 to vector<16x32xf32>
    %144 = arith.mulf %142, %143 : vector<16x32xf32>
    %c3_109 = arith.constant 3 : index
    %c0_110 = arith.constant 0 : index
    %c0_111 = arith.constant 0 : index
    %145 = vector.load %arg7[%c3_109, %c0_110, %c0_111] : memref<4x128x32xf32, #tpu.memory_space<vmem>>, vector<1x128x32xf32>
    %146 = vector.shape_cast %145 : vector<1x128x32xf32> to vector<128x32xf32>
    %cst_112 = arith.constant dense<0.000000e+00> : vector<16x32xf32>
    %147 = tpu.matmul %3, %146, %cst_112 {dimension_numbers = #tpu.dot_dimension_numbers<[1], [0], [0], [1], [0, 0, 1, 1], [], []>} : vector<16x128xf32>, vector<128x32xf32>, vector<16x32xf32> -> vector<16x32xf32>
    %c3_113 = arith.constant 3 : index
    %c0_114 = arith.constant 0 : index
    %c0_115 = arith.constant 0 : index
    %148 = vector.load %arg8[%c3_113, %c0_114, %c0_115] : memref<4x1x32xf32, #tpu.memory_space<vmem>>, vector<1x1x32xf32>
    %149 = vector.shape_cast %148 : vector<1x1x32xf32> to vector<1x32xf32>
    %150 = vector.broadcast %149 : vector<1x32xf32> to vector<16x32xf32>
    %151 = arith.addf %147, %150 : vector<16x32xf32>
    %c3_116 = arith.constant 3 : index
    %c0_117 = arith.constant 0 : index
    %c0_118 = arith.constant 0 : index
    %152 = vector.load %arg9[%c3_116, %c0_117, %c0_118] : memref<4x128x32xf32, #tpu.memory_space<vmem>>, vector<1x128x32xf32>
    %153 = vector.shape_cast %152 : vector<1x128x32xf32> to vector<128x32xf32>
    %cst_119 = arith.constant dense<0.000000e+00> : vector<16x32xf32>
    %154 = tpu.matmul %3, %153, %cst_119 {dimension_numbers = #tpu.dot_dimension_numbers<[1], [0], [0], [1], [0, 0, 1, 1], [], []>} : vector<16x128xf32>, vector<128x32xf32>, vector<16x32xf32> -> vector<16x32xf32>
    %c3_120 = arith.constant 3 : index
    %c0_121 = arith.constant 0 : index
    %c0_122 = arith.constant 0 : index
    %155 = vector.load %arg10[%c3_120, %c0_121, %c0_122] : memref<4x1x32xf32, #tpu.memory_space<vmem>>, vector<1x1x32xf32>
    %156 = vector.shape_cast %155 : vector<1x1x32xf32> to vector<1x32xf32>
    %157 = vector.broadcast %156 : vector<1x32xf32> to vector<16x32xf32>
    %158 = arith.addf %154, %157 : vector<16x32xf32>
    %cst_123 = arith.constant dense<0.000000e+00> : vector<16x16xf32>
    %159 = tpu.matmul %144, %151, %cst_123 {dimension_numbers = #tpu.dot_dimension_numbers<[1], [1], [0], [0], [0, 0, 1, 0], [], []>} : vector<16x32xf32>, vector<16x32xf32>, vector<16x16xf32> -> vector<16x16xf32>
    %cst_124 = arith.constant 0.000000e+00 : f32
    %160 = vector.broadcast %cst_124 : f32 to vector<16x16xf32>
    %161 = arith.cmpf oeq, %5, %160 : vector<16x16xf32>
    %cst_125 = arith.constant -1.000000e+10 : f32
    %162 = vector.broadcast %cst_125 : f32 to vector<16x16xf32>
    %163 = arith.select %161, %162, %159 : vector<16x16xi1>, vector<16x16xf32>
    %cst_126 = arith.constant dense<0xFF800000> : vector<16xf32>
    %164 = vector.multi_reduction <maximumf>, %163, %cst_126 [1] : vector<16x16xf32> to vector<16xf32>
    %165 = vector.shape_cast %164 : vector<16xf32> to vector<16x1xf32>
    %166 = vector.broadcast %165 : vector<16x1xf32> to vector<16x16xf32>
    %167 = arith.subf %163, %166 : vector<16x16xf32>
    %168 = math.exp %167 : vector<16x16xf32>
    %cst_127 = arith.constant dense<0.000000e+00> : vector<16xf32>
    %169 = vector.multi_reduction <add>, %168, %cst_127 [1] : vector<16x16xf32> to vector<16xf32>
    %170 = vector.shape_cast %169 : vector<16xf32> to vector<16x1xf32>
    %171 = tpu.reciprocal %170 {approx = true} : vector<16x1xf32> -> vector<16x1xf32>
    %172 = vector.broadcast %171 : vector<16x1xf32> to vector<16x16xf32>
    %173 = arith.mulf %168, %172 : vector<16x16xf32>
    %cst_128 = arith.constant dense<0.000000e+00> : vector<16x32xf32>
    %174 = tpu.matmul %173, %158, %cst_128 {dimension_numbers = #tpu.dot_dimension_numbers<[1], [0], [0], [1], [0, 0, 1, 1], [], []>} : vector<16x16xf32>, vector<16x32xf32>, vector<16x32xf32> -> vector<16x32xf32>
    %c3_129 = arith.constant 3 : index
    %c0_130 = arith.constant 0 : index
    %c0_131 = arith.constant 0 : index
    %175 = vector.load %arg11[%c3_129, %c0_130, %c0_131] : memref<4x32x128xf32, #tpu.memory_space<vmem>>, vector<1x32x128xf32>
    %176 = vector.shape_cast %175 : vector<1x32x128xf32> to vector<32x128xf32>
    %cst_132 = arith.constant dense<0.000000e+00> : vector<16x128xf32>
    %177 = tpu.matmul %174, %176, %cst_132 {dimension_numbers = #tpu.dot_dimension_numbers<[1], [0], [0], [1], [0, 0, 1, 1], [], []>} : vector<16x32xf32>, vector<32x128xf32>, vector<16x128xf32> -> vector<16x128xf32>
    %178 = arith.addf %135, %177 : vector<16x128xf32>
    %c0_133 = arith.constant 0 : index
    %c0_134 = arith.constant 0 : index
    %179 = vector.load %arg12[%c0_133, %c0_134] : memref<1x128xf32, #tpu.memory_space<vmem>>, vector<1x128xf32>
    %180 = vector.broadcast %179 : vector<1x128xf32> to vector<16x128xf32>
    %181 = arith.addf %178, %180 : vector<16x128xf32>
    %182 = arith.addf %1, %181 : vector<16x128xf32>
    %c0_135 = arith.constant 0 : index
    %c0_136 = arith.constant 0 : index
    %183 = vector.load %arg13[%c0_135, %c0_136] : memref<1x128xf32, #tpu.memory_space<vmem>>, vector<1x128xf32>
    %c0_137 = arith.constant 0 : index
    %c0_138 = arith.constant 0 : index
    %184 = vector.load %arg14[%c0_137, %c0_138] : memref<1x128xf32, #tpu.memory_space<vmem>>, vector<1x128xf32>
    %cst_139 = arith.constant dense<0.000000e+00> : vector<16xf32>
    %185 = vector.multi_reduction <add>, %182, %cst_139 [1] : vector<16x128xf32> to vector<16xf32>
    %186 = vector.shape_cast %185 : vector<16xf32> to vector<16x1xf32>
    %cst_140 = arith.constant 1.280000e+02 : f32
    %187 = vector.broadcast %cst_140 : f32 to vector<16x1xf32>
    %188 = arith.divf %186, %187 : vector<16x1xf32>
    %189 = vector.broadcast %188 : vector<16x1xf32> to vector<16x128xf32>
    %190 = arith.subf %182, %189 : vector<16x128xf32>
    %191 = arith.mulf %190, %190 : vector<16x128xf32>
    %cst_141 = arith.constant dense<0.000000e+00> : vector<16xf32>
    %192 = vector.multi_reduction <add>, %191, %cst_141 [1] : vector<16x128xf32> to vector<16xf32>
    %193 = vector.shape_cast %192 : vector<16xf32> to vector<16x1xf32>
    %cst_142 = arith.constant 1.280000e+02 : f32
    %194 = vector.broadcast %cst_142 : f32 to vector<16x1xf32>
    %195 = arith.divf %193, %194 : vector<16x1xf32>
    %cst_143 = arith.constant 9.99999974E-6 : f32
    %196 = vector.broadcast %cst_143 : f32 to vector<16x1xf32>
    %197 = arith.addf %195, %196 : vector<16x1xf32>
    %198 = math.rsqrt %197 : vector<16x1xf32>
    %199 = vector.broadcast %198 : vector<16x1xf32> to vector<16x128xf32>
    %200 = arith.mulf %190, %199 : vector<16x128xf32>
    %201 = vector.broadcast %183 : vector<1x128xf32> to vector<16x128xf32>
    %202 = arith.mulf %200, %201 : vector<16x128xf32>
    %203 = vector.broadcast %184 : vector<1x128xf32> to vector<16x128xf32>
    %204 = arith.addf %202, %203 : vector<16x128xf32>
    %c0_144 = arith.constant 0 : index
    %c0_145 = arith.constant 0 : index
    %c0_146 = arith.constant 0 : index
    %205 = vector.load %arg15[%c0_144, %c0_145, %c0_146] : memref<1x16x128xf32, #tpu.memory_space<vmem>>, vector<1x16x128xf32>
    %206 = vector.shape_cast %205 : vector<1x16x128xf32> to vector<16x128xf32>
    %207 = vector.shape_cast %204 : vector<16x128xf32> to vector<1x16x128xf32>
    tpu.vector_store %arg15[%c0_144, %c0_145, %c0_146], %207 {strides = array<i32>} : memref<1x16x128xf32, #tpu.memory_space<vmem>>, vector<1x16x128xf32>,
    return
  }
  func.func @transform_0(%arg0: i32, %arg1: i32) -> (i32, i32, i32) {
    %c0_i32 = arith.constant 0 : i32
    %c0_i32_0 = arith.constant 0 : i32
    return %arg0, %arg1, %c0_i32 : i32, i32, i32
  }
  func.func @transform_1(%arg0: i32, %arg1: i32) -> (i32, i32, i32) {
    %c0_i32 = arith.constant 0 : i32
    %c0_i32_0 = arith.constant 0 : i32
    %c0_i32_1 = arith.constant 0 : i32
    return %arg0, %c0_i32, %c0_i32_0 : i32, i32, i32
  }
  func.func @transform_2(%arg0: i32, %arg1: i32) -> (i32, i32, i32) {
    %c0_i32 = arith.constant 0 : i32
    %c0_i32_0 = arith.constant 0 : i32
    return %arg0, %arg1, %c0_i32 : i32, i32, i32
  }
  func.func @transform_3(%arg0: i32, %arg1: i32) -> (i32, i32, i32) {
    %c0_i32 = arith.constant 0 : i32
    %c0_i32_0 = arith.constant 0 : i32
    %c0_i32_1 = arith.constant 0 : i32
    %c0_i32_2 = arith.constant 0 : i32
    return %c0_i32, %c0_i32_0, %c0_i32_1 : i32, i32, i32
  }
  func.func @transform_4(%arg0: i32, %arg1: i32) -> (i32, i32, i32) {
    %c0_i32 = arith.constant 0 : i32
    %c0_i32_0 = arith.constant 0 : i32
    %c0_i32_1 = arith.constant 0 : i32
    %c0_i32_2 = arith.constant 0 : i32
    return %c0_i32, %c0_i32_0, %c0_i32_1 : i32, i32, i32
  }
  func.func @transform_5(%arg0: i32, %arg1: i32) -> (i32, i32, i32) {
    %c0_i32 = arith.constant 0 : i32
    %c0_i32_0 = arith.constant 0 : i32
    %c0_i32_1 = arith.constant 0 : i32
    %c0_i32_2 = arith.constant 0 : i32
    return %c0_i32, %c0_i32_0, %c0_i32_1 : i32, i32, i32
  }
  func.func @transform_6(%arg0: i32, %arg1: i32) -> (i32, i32, i32) {
    %c0_i32 = arith.constant 0 : i32
    %c0_i32_0 = arith.constant 0 : i32
    %c0_i32_1 = arith.constant 0 : i32
    %c0_i32_2 = arith.constant 0 : i32
    return %c0_i32, %c0_i32_0, %c0_i32_1 : i32, i32, i32
  }
  func.func @transform_7(%arg0: i32, %arg1: i32) -> (i32, i32, i32) {
    %c0_i32 = arith.constant 0 : i32
    %c0_i32_0 = arith.constant 0 : i32
    %c0_i32_1 = arith.constant 0 : i32
    %c0_i32_2 = arith.constant 0 : i32
    return %c0_i32, %c0_i32_0, %c0_i32_1 : i32, i32, i32
  }
  func.func @transform_8(%arg0: i32, %arg1: i32) -> (i32, i32, i32) {
    %c0_i32 = arith.constant 0 : i32
    %c0_i32_0 = arith.constant 0 : i32
    %c0_i32_1 = arith.constant 0 : i32
    %c0_i32_2 = arith.constant 0 : i32
    return %c0_i32, %c0_i32_0, %c0_i32_1 : i32, i32, i32
  }
  func.func @transform_9(%arg0: i32, %arg1: i32) -> (i32, i32, i32) {
    %c0_i32 = arith.constant 0 : i32
    %c0_i32_0 = arith.constant 0 : i32
    %c0_i32_1 = arith.constant 0 : i32
    %c0_i32_2 = arith.constant 0 : i32
    return %c0_i32, %c0_i32_0, %c0_i32_1 : i32, i32, i32
  }
  func.func @transform_10(%arg0: i32, %arg1: i32) -> (i32, i32) {
    %c0_i32 = arith.constant 0 : i32
    %c0_i32_0 = arith.constant 0 : i32
    %c0_i32_1 = arith.constant 0 : i32
    return %c0_i32, %c0_i32_0 : i32, i32
  }
  func.func @transform_11(%arg0: i32, %arg1: i32) -> (i32, i32) {
    %c0_i32 = arith.constant 0 : i32
    %c0_i32_0 = arith.constant 0 : i32
    %c0_i32_1 = arith.constant 0 : i32
    return %c0_i32, %c0_i32_0 : i32, i32
  }
  func.func @transform_12(%arg0: i32, %arg1: i32) -> (i32, i32) {
    %c0_i32 = arith.constant 0 : i32
    %c0_i32_0 = arith.constant 0 : i32
    %c0_i32_1 = arith.constant 0 : i32
    return %c0_i32, %c0_i32_0 : i32, i32
  }
  func.func @transform_13(%arg0: i32, %arg1: i32) -> (i32, i32, i32) {
    %c0_i32 = arith.constant 0 : i32
    %c0_i32_0 = arith.constant 0 : i32
    return %arg0, %arg1, %c0_i32 : i32, i32, i32
  }
}

</mosaic_0001>

<llo_original>
// kernel: tpu_custom_call.1
$region0: #{tpu_custom_call.1}
  #allocation0 [shape = 'u32[]', space=smem, size = 0x4, offset = 0x4, fixed_abs, tag = 'smem constant byte address 0x4 - core index']
  #allocation1 [shape = 'u32[72,128]{1,0:T(1,128)}', space=vmem, size = 0x9000, scoped, tag = 'internal scratch']
  %s0 = inlined_call_operand.vmem [shape: f32[2,16,128], index: 0, kind: input, shape index: {}]
  %s1 = inlined_call_operand.vmem [shape: f32[2,16,128], index: 1, kind: input, shape index: {}]
  %s2 = inlined_call_operand.vmem [shape: f32[2,16,16], index: 2, kind: input, shape index: {}]
  %s3 = inlined_call_operand.vmem [shape: f32[4,128,32], index: 3, kind: input, shape index: {}]
  %s4 = inlined_call_operand.vmem [shape: f32[4,1,32], index: 4, kind: input, shape index: {}]
  %s5 = inlined_call_operand.vmem [shape: f32[4,128,32], index: 5, kind: input, shape index: {}]
  %s6 = inlined_call_operand.vmem [shape: f32[4,1,32], index: 6, kind: input, shape index: {}]
  %s7 = inlined_call_operand.vmem [shape: f32[4,128,32], index: 7, kind: input, shape index: {}]
  %s8 = inlined_call_operand.vmem [shape: f32[4,1,32], index: 8, kind: input, shape index: {}]
  %s9 = inlined_call_operand.vmem [shape: f32[4,32,128], index: 9, kind: input, shape index: {}]
  %s10 = inlined_call_operand.vmem [shape: f32[1,128], index: 10, kind: input, shape index: {}]
  %s11 = inlined_call_operand.vmem [shape: f32[1,128], index: 11, kind: input, shape index: {}]
  %s12 = inlined_call_operand.vmem [shape: f32[1,128], index: 12, kind: input, shape index: {}]
  %s13 = inlined_call_operand.hbm [shape: f32[2,16,128], index: 13, kind: output, shape index: {}]
  %s14 = sld [smem:[#allocation0]]
  $region85: #{tpu_custom_call.1} parent=0
    _
  %s16 = ssub.s32 1, %s14
  %s17 = scalar_select 0, %s16, %s14
  $region1: #{tpu_custom_call.1} parent=0
    #allocation2 [shape = 'u8[16384]{0}', space=vmem, size = 0x4000, scoped, tag = 'output window, operand 0']
    #allocation3 [shape = 's32[2]{0}', space=sflag, size = 0x8, scoped, tag = 'scoped memory for tpu_custom_call.1']
    %18 = vsyncpa [#allocation3], 0
    %s19 = scalar_lea.sflag [#allocation3], 1
    %20 = vsyncpa %s19, 0
    loop: start=0, step=1, limit=4
    $region2: #{tpu_custom_call.1} parent=1 // loop_pre_header
      _
    $region3: #{tpu_custom_call.1} parent=1 // loop_header
      %s22 = sphi 0, %s26
      %p23 = scmp.ge.s32.totalorder %s22, 4
      %s29 = sphi 0, %s41
      %s30 = sphi 0, %s37
      %s31 = sphi 0, %s29
      %s32 = sphi 0, %s30
      %s33 = sphi 0, %s31
      %s34 = sphi 0, %s32
      %s46 = sphi 0, %s48
      %s49 = sphi 0, %s46
      %s50 = sphi 0, %s49
      %s66 = sphi 0, %s50
      %s72 = sphi 0, %s74
      %s75 = sphi 0, %s72
      %s76 = sphi 0, %s75
      %s92 = sphi 0, %s76
      %s100 = sphi 0, %s102
      %s103 = sphi 0, %s100
      %s104 = sphi 0, %s103
      %s120 = sphi 0, %s104
      %s124 = sphi 0, %s124
      %s126 = sphi 0, %s124
      %s127 = sphi 0, %s126
      %s141 = sphi 0, %s127
      %s145 = sphi 0, %s145
      %s147 = sphi 0, %s145
      %s148 = sphi 0, %s147
      %s162 = sphi 0, %s148
      %s166 = sphi 0, %s166
      %s168 = sphi 0, %s166
      %s169 = sphi 0, %s168
      %s183 = sphi 0, %s169
      %s187 = sphi 0, %s187
      %s189 = sphi 0, %s187
      %s190 = sphi 0, %s189
      %s204 = sphi 0, %s190
      %s208 = sphi 0, %s208
      %s210 = sphi 0, %s208
      %s211 = sphi 0, %s210
      %s225 = sphi 0, %s211
      %s229 = sphi 0, %s229
      %s231 = sphi 0, %s229
      %s232 = sphi 0, %s231
      %s246 = sphi 0, %s232
      %s250 = sphi 0, %s250
      %s252 = sphi 0, %s250
      %s253 = sphi 0, %s252
      %s267 = sphi 0, %s253
      %s271 = sphi 0, %s271
      %s273 = sphi 0, %s271
      %s274 = sphi 0, %s273
      %s288 = sphi 0, %s274
      %s292 = sphi 0, %s292
      %s294 = sphi 0, %s292
      %s295 = sphi 0, %s294
      %s309 = sphi 0, %s295
      %s313 = sphi 0, %s313
      %s315 = sphi 0, %s313
      %s316 = sphi 0, %s315
      %s330 = sphi 0, %s316
      %s338 = sphi 0, %s340
      %s341 = sphi 0, %s338
      %s342 = sphi 0, %s341
      %s358 = sphi 0, %s342
    $region4: #{tpu_custom_call.1} parent=1 // loop_header_branch
      %25 = sbr.rel (%p23) target = $region8
    $region5: #{tpu_custom_call.1} parent=1 // loop_body
      %s27 = ssub.s32 %s22, 1
      %s28 = ssub.s32 %s22, 2
      %s35 = sadd.s32 1, %s30
      %p36 = scmp.ge.s32.totalorder %s35, 1
      %s37 = scalar_select %p36, 0, %s35
      %s38 = sadd.s32 1, %s29
      %s39 = scalar_select %p36, %s38, %s29
      %p40 = scmp.ge.s32.totalorder %s39, 2
      %s41 = scalar_select %p40, 0, %s39
      %s42 = ssub.s32 %s29, %s41
      %s43 = ssub.s32 %s30, %s37
      %s44 = sor.u32 %s42, %s43
      %p45 = scmp.eq.s32.totalorder %s44, 0
      %s47 = sadd.s32 %s46, 1
      %s48 = scalar_select %p45, %s46, %s47
      %p51 = pneg %p45
      %p52 = scmp.eq.s32.totalorder %s22, 1
      %p53 = por %p51, %p52
      %p54 = scmp.ne.s32.totalorder %s46, %s49
      %p55 = scmp.eq.s32.totalorder %s22, 0
      %p56 = por %p54, %p55
      %p57 = scmp.ne.s32.totalorder %s46, %s49
      %p58 = scmp.eq.s32.totalorder %s27, 1
      %p59 = por %p57, %p58
      %p60 = scmp.ne.s32.totalorder %s49, %s50
      %p61 = scmp.eq.s32.totalorder %s27, 0
      %p62 = por %p60, %p61
      %p63 = scmp.ne.s32.totalorder %s49, %s50
      %p64 = scmp.eq.s32.totalorder %s28, 1
      %p65 = por %p63, %p64
      %p67 = scmp.ne.s32.totalorder %s50, %s66
      %p68 = scmp.eq.s32.totalorder %s28, 0
      %p69 = por %p67, %p68
      %s70 = ssub.s32 %s29, %s41
      %p71 = scmp.eq.s32.totalorder %s70, 0
      %s73 = sadd.s32 %s72, 1
      %s74 = scalar_select %p71, %s72, %s73
      %p77 = pneg %p71
      %p78 = scmp.eq.s32.totalorder %s22, 1
      %p79 = por %p77, %p78
      %p80 = scmp.ne.s32.totalorder %s72, %s75
      %p81 = scmp.eq.s32.totalorder %s22, 0
      %p82 = por %p80, %p81
      %p83 = scmp.ne.s32.totalorder %s72, %s75
      %p84 = scmp.eq.s32.totalorder %s27, 1
      %p85 = por %p83, %p84
      %p86 = scmp.ne.s32.totalorder %s75, %s76
      %p87 = scmp.eq.s32.totalorder %s27, 0
      %p88 = por %p86, %p87
      %p89 = scmp.ne.s32.totalorder %s75, %s76
      %p90 = scmp.eq.s32.totalorder %s28, 1
      %p91 = por %p89, %p90
      %p93 = scmp.ne.s32.totalorder %s76, %s92
      %p94 = scmp.eq.s32.totalorder %s28, 0
      %p95 = por %p93, %p94
      %s96 = ssub.s32 %s29, %s41
      %s97 = ssub.s32 %s30, %s37
      %s98 = sor.u32 %s96, %s97
      %p99 = scmp.eq.s32.totalorder %s98, 0
      %s101 = sadd.s32 %s100, 1
      %s102 = scalar_select %p99, %s100, %s101
      %p105 = pneg %p99
      %p106 = scmp.eq.s32.totalorder %s22, 1
      %p107 = por %p105, %p106
      %p108 = scmp.ne.s32.totalorder %s100, %s103
      %p109 = scmp.eq.s32.totalorder %s22, 0
      %p110 = por %p108, %p109
      %p111 = scmp.ne.s32.totalorder %s100, %s103
      %p112 = scmp.eq.s32.totalorder %s27, 1
      %p113 = por %p111, %p112
      %p114 = scmp.ne.s32.totalorder %s103, %s104
      %p115 = scmp.eq.s32.totalorder %s27, 0
      %p116 = por %p114, %p115
      %p117 = scmp.ne.s32.totalorder %s103, %s104
      %p118 = scmp.eq.s32.totalorder %s28, 1
      %p119 = por %p117, %p118
      %p121 = scmp.ne.s32.totalorder %s104, %s120
      %p122 = scmp.eq.s32.totalorder %s28, 0
      %p123 = por %p121, %p122
      %s125 = sadd.s32 %s124, 1
      %p128 = scmp.eq.s32.totalorder %s22, 1
      %p129 = scmp.ne.s32.totalorder %s124, %s126
      %p130 = scmp.eq.s32.totalorder %s22, 0
      %p131 = por %p129, %p130
      %p132 = scmp.ne.s32.totalorder %s124, %s126
      %p133 = scmp.eq.s32.totalorder %s27, 1
      %p134 = por %p132, %p133
      %p135 = scmp.ne.s32.totalorder %s126, %s127
      %p136 = scmp.eq.s32.totalorder %s27, 0
      %p137 = por %p135, %p136
      %p138 = scmp.ne.s32.totalorder %s126, %s127
      %p139 = scmp.eq.s32.totalorder %s28, 1
      %p140 = por %p138, %p139
      %p142 = scmp.ne.s32.totalorder %s127, %s141
      %p143 = scmp.eq.s32.totalorder %s28, 0
      %p144 = por %p142, %p143
      %s146 = sadd.s32 %s145, 1
      %p149 = scmp.eq.s32.totalorder %s22, 1
      %p150 = scmp.ne.s32.totalorder %s145, %s147
      %p151 = scmp.eq.s32.totalorder %s22, 0
      %p152 = por %p150, %p151
      %p153 = scmp.ne.s32.totalorder %s145, %s147
      %p154 = scmp.eq.s32.totalorder %s27, 1
      %p155 = por %p153, %p154
      %p156 = scmp.ne.s32.totalorder %s147, %s148
      %p157 = scmp.eq.s32.totalorder %s27, 0
      %p158 = por %p156, %p157
      %p159 = scmp.ne.s32.totalorder %s147, %s148
      %p160 = scmp.eq.s32.totalorder %s28, 1
      %p161 = por %p159, %p160
      %p163 = scmp.ne.s32.totalorder %s148, %s162
      %p164 = scmp.eq.s32.totalorder %s28, 0
      %p165 = por %p163, %p164
      %s167 = sadd.s32 %s166, 1
      %p170 = scmp.eq.s32.totalorder %s22, 1
      %p171 = scmp.ne.s32.totalorder %s166, %s168
      %p172 = scmp.eq.s32.totalorder %s22, 0
      %p173 = por %p171, %p172
      %p174 = scmp.ne.s32.totalorder %s166, %s168
      %p175 = scmp.eq.s32.totalorder %s27, 1
      %p176 = por %p174, %p175
      %p177 = scmp.ne.s32.totalorder %s168, %s169
      %p178 = scmp.eq.s32.totalorder %s27, 0
      %p179 = por %p177, %p178
      %p180 = scmp.ne.s32.totalorder %s168, %s169
      %p181 = scmp.eq.s32.totalorder %s28, 1
      %p182 = por %p180, %p181
      %p184 = scmp.ne.s32.totalorder %s169, %s183
      %p185 = scmp.eq.s32.totalorder %s28, 0
      %p186 = por %p184, %p185
      %s188 = sadd.s32 %s187, 1
      %p191 = scmp.eq.s32.totalorder %s22, 1
      %p192 = scmp.ne.s32.totalorder %s187, %s189
      %p193 = scmp.eq.s32.totalorder %s22, 0
      %p194 = por %p192, %p193
      %p195 = scmp.ne.s32.totalorder %s187, %s189
      %p196 = scmp.eq.s32.totalorder %s27, 1
      %p197 = por %p195, %p196
      %p198 = scmp.ne.s32.totalorder %s189, %s190
      %p199 = scmp.eq.s32.totalorder %s27, 0
      %p200 = por %p198, %p199
      %p201 = scmp.ne.s32.totalorder %s189, %s190
      %p202 = scmp.eq.s32.totalorder %s28, 1
      %p203 = por %p201, %p202
      %p205 = scmp.ne.s32.totalorder %s190, %s204
      %p206 = scmp.eq.s32.totalorder %s28, 0
      %p207 = por %p205, %p206
      %s209 = sadd.s32 %s208, 1
      %p212 = scmp.eq.s32.totalorder %s22, 1
      %p213 = scmp.ne.s32.totalorder %s208, %s210
      %p214 = scmp.eq.s32.totalorder %s22, 0
      %p215 = por %p213, %p214
      %p216 = scmp.ne.s32.totalorder %s208, %s210
      %p217 = scmp.eq.s32.totalorder %s27, 1
      %p218 = por %p216, %p217
      %p219 = scmp.ne.s32.totalorder %s210, %s211
      %p220 = scmp.eq.s32.totalorder %s27, 0
      %p221 = por %p219, %p220
      %p222 = scmp.ne.s32.totalorder %s210, %s211
      %p223 = scmp.eq.s32.totalorder %s28, 1
      %p224 = por %p222, %p223
      %p226 = scmp.ne.s32.totalorder %s211, %s225
      %p227 = scmp.eq.s32.totalorder %s28, 0
      %p228 = por %p226, %p227
      %s230 = sadd.s32 %s229, 1
      %p233 = scmp.eq.s32.totalorder %s22, 1
      %p234 = scmp.ne.s32.totalorder %s229, %s231
      %p235 = scmp.eq.s32.totalorder %s22, 0
      %p236 = por %p234, %p235
      %p237 = scmp.ne.s32.totalorder %s229, %s231
      %p238 = scmp.eq.s32.totalorder %s27, 1
      %p239 = por %p237, %p238
      %p240 = scmp.ne.s32.totalorder %s231, %s232
      %p241 = scmp.eq.s32.totalorder %s27, 0
      %p242 = por %p240, %p241
      %p243 = scmp.ne.s32.totalorder %s231, %s232
      %p244 = scmp.eq.s32.totalorder %s28, 1
      %p245 = por %p243, %p244
      %p247 = scmp.ne.s32.totalorder %s232, %s246
      %p248 = scmp.eq.s32.totalorder %s28, 0
      %p249 = por %p247, %p248
      %s251 = sadd.s32 %s250, 1
      %p254 = scmp.eq.s32.totalorder %s22, 1
      %p255 = scmp.ne.s32.totalorder %s250, %s252
      %p256 = scmp.eq.s32.totalorder %s22, 0
      %p257 = por %p255, %p256
      %p258 = scmp.ne.s32.totalorder %s250, %s252
      %p259 = scmp.eq.s32.totalorder %s27, 1
      %p260 = por %p258, %p259
      %p261 = scmp.ne.s32.totalorder %s252, %s253
      %p262 = scmp.eq.s32.totalorder %s27, 0
      %p263 = por %p261, %p262
      %p264 = scmp.ne.s32.totalorder %s252, %s253
      %p265 = scmp.eq.s32.totalorder %s28, 1
      %p266 = por %p264, %p265
      %p268 = scmp.ne.s32.totalorder %s253, %s267
      %p269 = scmp.eq.s32.totalorder %s28, 0
      %p270 = por %p268, %p269
      %s272 = sadd.s32 %s271, 1
      %p275 = scmp.eq.s32.totalorder %s22, 1
      %p276 = scmp.ne.s32.totalorder %s271, %s273
      %p277 = scmp.eq.s32.totalorder %s22, 0
      %p278 = por %p276, %p277
      %p279 = scmp.ne.s32.totalorder %s271, %s273
      %p280 = scmp.eq.s32.totalorder %s27, 1
      %p281 = por %p279, %p280
      %p282 = scmp.ne.s32.totalorder %s273, %s274
      %p283 = scmp.eq.s32.totalorder %s27, 0
      %p284 = por %p282, %p283
      %p285 = scmp.ne.s32.totalorder %s273, %s274
      %p286 = scmp.eq.s32.totalorder %s28, 1
      %p287 = por %p285, %p286
      %p289 = scmp.ne.s32.totalorder %s274, %s288
      %p290 = scmp.eq.s32.totalorder %s28, 0
      %p291 = por %p289, %p290
      %s293 = sadd.s32 %s292, 1
      %p296 = scmp.eq.s32.totalorder %s22, 1
      %p297 = scmp.ne.s32.totalorder %s292, %s294
      %p298 = scmp.eq.s32.totalorder %s22, 0
      %p299 = por %p297, %p298
      %p300 = scmp.ne.s32.totalorder %s292, %s294
      %p301 = scmp.eq.s32.totalorder %s27, 1
      %p302 = por %p300, %p301
      %p303 = scmp.ne.s32.totalorder %s294, %s295
      %p304 = scmp.eq.s32.totalorder %s27, 0
      %p305 = por %p303, %p304
      %p306 = scmp.ne.s32.totalorder %s294, %s295
      %p307 = scmp.eq.s32.totalorder %s28, 1
      %p308 = por %p306, %p307
      %p310 = scmp.ne.s32.totalorder %s295, %s309
      %p311 = scmp.eq.s32.totalorder %s28, 0
      %p312 = por %p310, %p311
      %s314 = sadd.s32 %s313, 1
      %p317 = scmp.eq.s32.totalorder %s22, 1
      %p318 = scmp.ne.s32.totalorder %s313, %s315
      %p319 = scmp.eq.s32.totalorder %s22, 0
      %p320 = por %p318, %p319
      %p321 = scmp.ne.s32.totalorder %s313, %s315
      %p322 = scmp.eq.s32.totalorder %s27, 1
      %p323 = por %p321, %p322
      %p324 = scmp.ne.s32.totalorder %s315, %s316
      %p325 = scmp.eq.s32.totalorder %s27, 0
      %p326 = por %p324, %p325
      %p327 = scmp.ne.s32.totalorder %s315, %s316
      %p328 = scmp.eq.s32.totalorder %s28, 1
      %p329 = por %p327, %p328
      %p331 = scmp.ne.s32.totalorder %s316, %s330
      %p332 = scmp.eq.s32.totalorder %s28, 0
      %p333 = por %p331, %p332
      %s334 = ssub.s32 %s29, %s41
      %s335 = ssub.s32 %s30, %s37
      %s336 = sor.u32 %s334, %s335
      %p337 = scmp.eq.s32.totalorder %s336, 0
      %s339 = sadd.s32 %s338, 1
      %s340 = scalar_select %p337, %s338, %s339
      %p343 = pneg %p337
      %p344 = scmp.eq.s32.totalorder %s22, 1
      %p345 = por %p343, %p344
      %p346 = scmp.ne.s32.totalorder %s338, %s341
      %p347 = scmp.eq.s32.totalorder %s22, 0
      %p348 = por %p346, %p347
      %p349 = scmp.ne.s32.totalorder %s338, %s341
      %p350 = scmp.eq.s32.totalorder %s27, 1
      %p351 = por %p349, %p350
      %p352 = scmp.ne.s32.totalorder %s341, %s342
      %p353 = scmp.eq.s32.totalorder %s27, 0
      %p354 = por %p352, %p353
      %p355 = scmp.ne.s32.totalorder %s341, %s342
      %p356 = scmp.eq.s32.totalorder %s28, 1
      %p357 = por %p355, %p356
      %p359 = scmp.ne.s32.totalorder %s342, %s358
      %p360 = scmp.eq.s32.totalorder %s28, 0
      %p361 = por %p359, %p360
      %p362 = scmp.le.s32.totalorder 1, %s22
      %p363 = scmp.lt.s32.totalorder %s22, 3
      %p364 = pnand %p362, %p363
      %p365 = pneg %p364
      // Predicated region
      $region9: #{tpu_custom_call.1} parent=5 // pred_check
        _
      $region10: #{tpu_custom_call.1} parent=5 // pred_check_branch
        %367 = sbr.rel (%p364) target = $region12
      $region11: #{tpu_custom_call.1} parent=5 // pred_region
        %s368 = ssub.s32 %s22, 1
        // Predicated region
        $region13: #{tpu_custom_call.1} parent=11 // pred_check
          %p369 = pneg %p137
        $region14: #{tpu_custom_call.1} parent=11 // pred_check_branch
          %371 = sbr.rel (%p369) target = $region16
        $region15: #{tpu_custom_call.1} parent=11 // pred_region
          _
        $region16: #{tpu_custom_call.1} parent=11 // pred_fallthru
          _
        // Predicated region
        $region17: #{tpu_custom_call.1} parent=11 // pred_check
          %p372 = pneg %p158
        $region18: #{tpu_custom_call.1} parent=11 // pred_check_branch
          %374 = sbr.rel (%p372) target = $region20
        $region19: #{tpu_custom_call.1} parent=11 // pred_region
          _
        $region20: #{tpu_custom_call.1} parent=11 // pred_fallthru
          _
        // Predicated region
        $region21: #{tpu_custom_call.1} parent=11 // pred_check
          %p375 = pneg %p179
        $region22: #{tpu_custom_call.1} parent=11 // pred_check_branch
          %377 = sbr.rel (%p375) target = $region24
        $region23: #{tpu_custom_call.1} parent=11 // pred_region
          _
        $region24: #{tpu_custom_call.1} parent=11 // pred_fallthru
          _
        // Predicated region
        $region25: #{tpu_custom_call.1} parent=11 // pred_check
          %p378 = pneg %p200
        $region26: #{tpu_custom_call.1} parent=11 // pred_check_branch
          %380 = sbr.rel (%p378) target = $region28
        $region27: #{tpu_custom_call.1} parent=11 // pred_region
          _
        $region28: #{tpu_custom_call.1} parent=11 // pred_fallthru
          _
        // Predicated region
        $region29: #{tpu_custom_call.1} parent=11 // pred_check
          %p381 = pneg %p221
        $region30: #{tpu_custom_call.1} parent=11 // pred_check_branch
          %383 = sbr.rel (%p381) target = $region32
        $region31: #{tpu_custom_call.1} parent=11 // pred_region
          _
        $region32: #{tpu_custom_call.1} parent=11 // pred_fallthru
          _
        // Predicated region
        $region33: #{tpu_custom_call.1} parent=11 // pred_check
          %p384 = pneg %p242
        $region34: #{tpu_custom_call.1} parent=11 // pred_check_branch
          %386 = sbr.rel (%p384) target = $region36
        $region35: #{tpu_custom_call.1} parent=11 // pred_region
          _
        $region36: #{tpu_custom_call.1} parent=11 // pred_fallthru
          _
        // Predicated region
        $region37: #{tpu_custom_call.1} parent=11 // pred_check
          %p387 = pneg %p263
        $region38: #{tpu_custom_call.1} parent=11 // pred_check_branch
          %389 = sbr.rel (%p387) target = $region40
        $region39: #{tpu_custom_call.1} parent=11 // pred_region
          _
        $region40: #{tpu_custom_call.1} parent=11 // pred_fallthru
          _
        // Predicated region
        $region41: #{tpu_custom_call.1} parent=11 // pred_check
          %p390 = pneg %p284
        $region42: #{tpu_custom_call.1} parent=11 // pred_check_branch
          %392 = sbr.rel (%p390) target = $region44
        $region43: #{tpu_custom_call.1} parent=11 // pred_region
          _
        $region44: #{tpu_custom_call.1} parent=11 // pred_fallthru
          _
        // Predicated region
        $region45: #{tpu_custom_call.1} parent=11 // pred_check
          %p393 = pneg %p305
        $region46: #{tpu_custom_call.1} parent=11 // pred_check_branch
          %395 = sbr.rel (%p393) target = $region48
        $region47: #{tpu_custom_call.1} parent=11 // pred_region
          _
        $region48: #{tpu_custom_call.1} parent=11 // pred_fallthru
          _
        // Predicated region
        $region49: #{tpu_custom_call.1} parent=11 // pred_check
          %p396 = pneg %p326
        $region50: #{tpu_custom_call.1} parent=11 // pred_check_branch
          %398 = sbr.rel (%p396) target = $region52
        $region51: #{tpu_custom_call.1} parent=11 // pred_region
          _
        $region52: #{tpu_custom_call.1} parent=11 // pred_fallthru
          _
      $region12: #{tpu_custom_call.1} parent=5 // pred_fallthru
        _
      %p399 = scmp.lt.s32.totalorder %s22, 2
      // Predicated region
      $region53: #{tpu_custom_call.1} parent=5 // pred_check
        %p400 = pneg %p399
      $region54: #{tpu_custom_call.1} parent=5 // pred_check_branch
        %402 = sbr.rel (%p400) target = $region56
      $region55: #{tpu_custom_call.1} parent=5 // pred_region
        // Predicated region
        $region57: #{tpu_custom_call.1} parent=55 // pred_check
          %p403 = pneg %p56
        $region58: #{tpu_custom_call.1} parent=55 // pred_check_branch
          %405 = sbr.rel (%p403) target = $region60
        $region59: #{tpu_custom_call.1} parent=55 // pred_region
          %s406 = smul.u32 2, %s30
          %p407 = scmp.lt.s32.totalorder %s29, 1
          %s408 = scalar_select %p407, %s29, 1
          %p409 = scmp.lt.s32.totalorder %s406, 1
          %s410 = scalar_select %p409, %s406, 1
          %s411 = smul.addr %s408, 2
          %s412 = sadd.s32 %s410, %s411
          %s413 = smul.addr %s412, 8
          %s414 = scalar_lea.vmem %s0, %s413
          %s415 = smul.u32 2, %s30
        $region60: #{tpu_custom_call.1} parent=55 // pred_fallthru
          _
        // Predicated region
        $region61: #{tpu_custom_call.1} parent=55 // pred_check
          %p416 = pneg %p82
        $region62: #{tpu_custom_call.1} parent=55 // pred_check_branch
          %418 = sbr.rel (%p416) target = $region64
        $region63: #{tpu_custom_call.1} parent=55 // pred_region
          %p419 = scmp.lt.s32.totalorder %s29, 1
          %s420 = scalar_select %p419, %s29, 1
          %s421 = smul.addr %s420, 2
          %s422 = smul.addr %s421, 8
          %s423 = scalar_lea.vmem %s1, %s422
        $region64: #{tpu_custom_call.1} parent=55 // pred_fallthru
          _
        // Predicated region
        $region65: #{tpu_custom_call.1} parent=55 // pred_check
          %p424 = pneg %p110
        $region66: #{tpu_custom_call.1} parent=55 // pred_check_branch
          %426 = sbr.rel (%p424) target = $region68
        $region67: #{tpu_custom_call.1} parent=55 // pred_region
          %s427 = smul.u32 2, %s30
          %p428 = scmp.lt.s32.totalorder %s29, 1
          %s429 = scalar_select %p428, %s29, 1
          %p430 = scmp.lt.s32.totalorder %s427, 1
          %s431 = scalar_select %p430, %s427, 1
          %s432 = smul.addr %s429, 2
          %s433 = sadd.s32 %s431, %s432
          %s434 = smul.addr %s433, 8
          %s435 = scalar_lea.vmem %s2, %s434
          %s436 = smul.u32 2, %s30
        $region68: #{tpu_custom_call.1} parent=55 // pred_fallthru
          _
      $region56: #{tpu_custom_call.1} parent=5 // pred_fallthru
        _
      %p437 = scmp.le.s32.totalorder 1, %s22
      %p438 = scmp.lt.s32.totalorder %s22, 3
      %p439 = pnand %p437, %p438
      %p440 = pneg %p439
      // Predicated region
      $region69: #{tpu_custom_call.1} parent=5 // pred_check
        _
      $region70: #{tpu_custom_call.1} parent=5 // pred_check_branch
        %442 = sbr.rel (%p439) target = $region72
      $region71: #{tpu_custom_call.1} parent=5 // pred_region
        %s443 = ssub.s32 %s22, 1
        %s444 = smul.u32 2, %s32
        %p445 = scmp.lt.s32.totalorder %s31, 1
        %s446 = scalar_select %p445, %s31, 1
        %p447 = scmp.lt.s32.totalorder %s444, 1
        %s448 = scalar_select %p447, %s444, 1
        %s449 = smul.addr %s446, 2
        %s450 = sadd.s32 %s448, %s449
        %s451 = smul.addr %s450, 8
        %s452 = scalar_lea.vmem %s0, %s451
        %p453 = pneg %p62
        %p454 = pneg %p59
        %p455 = scmp.lt.s32.totalorder %s31, 1
        %s456 = scalar_select %p455, %s31, 1
        %s457 = smul.addr %s456, 2
        %s458 = smul.addr %s457, 8
        %s459 = scalar_lea.vmem %s1, %s458
        %p460 = pneg %p88
        %p461 = pneg %p85
        %s462 = smul.u32 2, %s32
        %p463 = scmp.lt.s32.totalorder %s31, 1
        %s464 = scalar_select %p463, %s31, 1
        %p465 = scmp.lt.s32.totalorder %s462, 1
        %s466 = scalar_select %p465, %s462, 1
        %s467 = smul.addr %s464, 2
        %s468 = sadd.s32 %s466, %s467
        %s469 = smul.addr %s468, 8
        %s470 = scalar_lea.vmem %s2, %s469
        %p471 = pneg %p116
        %p472 = pneg %p113
        %p473 = pneg %p137
        %p474 = pneg %p134
        %p475 = pneg %p158
        %p476 = pneg %p155
        %p477 = pneg %p179
        %p478 = pneg %p176
        %p479 = pneg %p200
        %p480 = pneg %p197
        %p481 = pneg %p221
        %p482 = pneg %p218
        %p483 = pneg %p242
        %p484 = pneg %p239
        %p485 = pneg %p263
        %p486 = pneg %p260
        %p487 = pneg %p284
        %p488 = pneg %p281
        %p489 = pneg %p305
        %p490 = pneg %p302
        %p491 = pneg %p326
        %p492 = pneg %p323
        %p493 = pneg %p354
        %p494 = pneg %p351
        %s495 = sand.u32 %s341, 1
        %s496 = scalar_lea.sflag [#allocation3], %s495
        %s497 = sand.u32 %s341, 1
        %s498 = smul.addr %s497, 16
        %s499 = scalar_lea.vmem [#allocation2], %s498
        %s500 = smul.u32 2, %s32
        %p501 = scmp.lt.s32.totalorder %s31, 1
        %s502 = scalar_select %p501, %s31, 1
        %p503 = scmp.lt.s32.totalorder %s500, 1
        %s504 = scalar_select %p503, %s500, 1
        %s505 = smul.addr %s502, 2
        %s506 = sadd.s32 %s504, %s505
        %s507 = smul.addr %s506, 8
        %s508 = scalar_lea.vmem %s0, %s507
        %s509 = smul.u32 2, %s32
        %p510 = scmp.lt.s32.totalorder %s31, 1
        %s511 = scalar_select %p510, %s31, 1
        %s512 = smul.addr %s511, 2
        %s513 = smul.addr %s512, 8
        %s514 = scalar_lea.vmem %s1, %s513
        %s515 = smul.u32 2, %s32
        %p516 = scmp.lt.s32.totalorder %s31, 1
        %s517 = scalar_select %p516, %s31, 1
        %p518 = scmp.lt.s32.totalorder %s515, 1
        %s519 = scalar_select %p518, %s515, 1
        %s520 = smul.addr %s517, 2
        %s521 = sadd.s32 %s519, %s520
        %s522 = smul.addr %s521, 8
        %s523 = scalar_lea.vmem %s2, %s522
        %s524 = smul.u32 2, %s32
        %s525 = smul.u32 2, %s32
        %v526 = vld [vmem:[%s508] sm:$0xff]
        %v527 = vld [vmem:[%s508 + $0x8] sm:$0xff]
        %v528 = vld [vmem:[%s514] sm:$0xff]
        %v529 = vld [vmem:[%s514 + $0x8] sm:$0xff]
        %v530 = vld [vmem:[%s523] sm:$0xff]
        %v531 = vld [vmem:[%s523 + $0x8] sm:$0xff]
        %v532 = vld [vmem:[%s3] sm:$0xff]
        %v533 = vld [vmem:[%s3 + $0x8] sm:$0xff]
        %v534 = vld [vmem:[%s3 + $0x10] sm:$0xff]
        %v535 = vld [vmem:[%s3 + $0x18] sm:$0xff]
        %v536 = vld [vmem:[%s3 + $0x20] sm:$0xff]
        %v537 = vld [vmem:[%s3 + $0x28] sm:$0xff]
        %v538 = vld [vmem:[%s3 + $0x30] sm:$0xff]
        %v539 = vld [vmem:[%s3 + $0x38] sm:$0xff]
        %v540 = vld [vmem:[%s3 + $0x40] sm:$0xff]
        %v541 = vld [vmem:[%s3 + $0x48] sm:$0xff]
        %v542 = vld [vmem:[%s3 + $0x50] sm:$0xff]
        %v543 = vld [vmem:[%s3 + $0x58] sm:$0xff]
        %v544 = vld [vmem:[%s3 + $0x60] sm:$0xff]
        %v545 = vld [vmem:[%s3 + $0x68] sm:$0xff]
        %v546 = vld [vmem:[%s3 + $0x70] sm:$0xff]
        %v547 = vld [vmem:[%s3 + $0x78] sm:$0xff]
        %v548 = vld [vmem:[%s4] sm:$0x1]
        %v550 = vperm.slane %v548, 0
        %552 = vmatpush.msra.mxu0 %v547
        %553 = vmatpush.msra.mxu0 %v546
        %554 = vmatpush.msra.mxu0 %v545
        %555 = vmatpush.msra.mxu0 %v544
        %556 = vmatpush.msra.mxu0 %v543
        %557 = vmatpush.msra.mxu0 %v542
        %558 = vmatpush.msra.mxu0 %v541
        %559 = vmatpush.msra.mxu0 %v540
        %560 = vmatpush.msra.mxu0 %v539
        %561 = vmatpush.msra.mxu0 %v538
        %562 = vmatpush.msra.mxu0 %v537
        %563 = vmatpush.msra.mxu0 %v536
        %564 = vmatpush.msra.mxu0 %v535
        %565 = vmatpush.msra.mxu0 %v534
        %566 = vmatpush.msra.mxu0 %v533
        %567 = vmatpush.msra.mxu0 %v532
        %568 = vmatmul.f32.gmra.mxu0 %v526
        %v569 = vpop.f32.mrf.mxu0
        %v570 = vadd.f32 %v550, %v569
        %571 = vmatmul.f32.gmra.mxu0 %v527
        %v572 = vpop.f32.mrf.mxu0
        %v573 = vadd.f32 %v550, %v572
        %574 = vdwg.mxu0
        %v575 = vmul.f32 %v570, 0.17677669
        %v576 = vmul.f32 %v573, 0.17677669
        %v577 = vld [vmem:[%s5] sm:$0xff]
        %v578 = vld [vmem:[%s5 + $0x8] sm:$0xff]
        %v579 = vld [vmem:[%s5 + $0x10] sm:$0xff]
        %v580 = vld [vmem:[%s5 + $0x18] sm:$0xff]
        %v581 = vld [vmem:[%s5 + $0x20] sm:$0xff]
        %v582 = vld [vmem:[%s5 + $0x28] sm:$0xff]
        %v583 = vld [vmem:[%s5 + $0x30] sm:$0xff]
        %v584 = vld [vmem:[%s5 + $0x38] sm:$0xff]
        %v585 = vld [vmem:[%s5 + $0x40] sm:$0xff]
        %v586 = vld [vmem:[%s5 + $0x48] sm:$0xff]
        %v587 = vld [vmem:[%s5 + $0x50] sm:$0xff]
        %v588 = vld [vmem:[%s5 + $0x58] sm:$0xff]
        %v589 = vld [vmem:[%s5 + $0x60] sm:$0xff]
        %v590 = vld [vmem:[%s5 + $0x68] sm:$0xff]
        %v591 = vld [vmem:[%s5 + $0x70] sm:$0xff]
        %v592 = vld [vmem:[%s5 + $0x78] sm:$0xff]
        %v593 = vld [vmem:[%s6] sm:$0x1]
        %v595 = vperm.slane %v593, 0
        %597 = vmatpush.msra.mxu0 %v592
        %598 = vmatpush.msra.mxu0 %v591
        %599 = vmatpush.msra.mxu0 %v590
        %600 = vmatpush.msra.mxu0 %v589
        %601 = vmatpush.msra.mxu0 %v588
        %602 = vmatpush.msra.mxu0 %v587
        %603 = vmatpush.msra.mxu0 %v586
        %604 = vmatpush.msra.mxu0 %v585
        %605 = vmatpush.msra.mxu0 %v584
        %606 = vmatpush.msra.mxu0 %v583
        %607 = vmatpush.msra.mxu0 %v582
        %608 = vmatpush.msra.mxu0 %v581
        %609 = vmatpush.msra.mxu0 %v580
        %610 = vmatpush.msra.mxu0 %v579
        %611 = vmatpush.msra.mxu0 %v578
        %612 = vmatpush.msra.mxu0 %v577
        %613 = vmatmul.f32.gmra.mxu0 %v528
        %v614 = vpop.f32.mrf.mxu0
        %v615 = vadd.f32 %v595, %v614
        %616 = vmatmul.f32.gmra.mxu0 %v529
        %v617 = vpop.f32.mrf.mxu0
        %v618 = vadd.f32 %v595, %v617
        %619 = vdwg.mxu0
        %v620 = vld [vmem:[%s7] sm:$0xff]
        %v621 = vld [vmem:[%s7 + $0x8] sm:$0xff]
        %v622 = vld [vmem:[%s7 + $0x10] sm:$0xff]
        %v623 = vld [vmem:[%s7 + $0x18] sm:$0xff]
        %v624 = vld [vmem:[%s7 + $0x20] sm:$0xff]
        %v625 = vld [vmem:[%s7 + $0x28] sm:$0xff]
        %v626 = vld [vmem:[%s7 + $0x30] sm:$0xff]
        %v627 = vld [vmem:[%s7 + $0x38] sm:$0xff]
        %v628 = vld [vmem:[%s7 + $0x40] sm:$0xff]
        %v629 = vld [vmem:[%s7 + $0x48] sm:$0xff]
        %v630 = vld [vmem:[%s7 + $0x50] sm:$0xff]
        %v631 = vld [vmem:[%s7 + $0x58] sm:$0xff]
        %v632 = vld [vmem:[%s7 + $0x60] sm:$0xff]
        %v633 = vld [vmem:[%s7 + $0x68] sm:$0xff]
        %v634 = vld [vmem:[%s7 + $0x70] sm:$0xff]
        %v635 = vld [vmem:[%s7 + $0x78] sm:$0xff]
        %v636 = vld [vmem:[%s8] sm:$0x1]
        %v638 = vperm.slane %v636, 0
        %640 = vmatpush.msra.mxu0 %v635
        %641 = vmatpush.msra.mxu0 %v634
        %642 = vmatpush.msra.mxu0 %v633
        %643 = vmatpush.msra.mxu0 %v632
        %644 = vmatpush.msra.mxu0 %v631
        %645 = vmatpush.msra.mxu0 %v630
        %646 = vmatpush.msra.mxu0 %v629
        %647 = vmatpush.msra.mxu0 %v628
        %648 = vmatpush.msra.mxu0 %v627
        %649 = vmatpush.msra.mxu0 %v626
        %650 = vmatpush.msra.mxu0 %v625
        %651 = vmatpush.msra.mxu0 %v624
        %652 = vmatpush.msra.mxu0 %v623
        %653 = vmatpush.msra.mxu0 %v622
        %654 = vmatpush.msra.mxu0 %v621
        %655 = vmatpush.msra.mxu0 %v620
        %656 = vmatmul.f32.gmra.mxu0 %v528
        %v657 = vpop.f32.mrf.mxu0
        %v658 = vadd.f32 %v638, %v657
        %659 = vmatmul.f32.gmra.mxu0 %v529
        %v660 = vpop.f32.mrf.mxu0
        %v661 = vadd.f32 %v638, %v660
        %662 = vdwg.mxu0
        %vm663 = vcmask 261120
        %v665 = vsel %vm663, %v575, 0
        %v668 = vsel %vm663, %v576, 0
        %v671 = vsel %vm663, %v615, 0
        %v674 = vsel %vm663, %v618, 0
        %676 = vmatpush.xpose.msra.mxu0 0.0
        %677 = vmatpush.xpose.msra.mxu0 0.0
        %678 = vmatpush.xpose.msra.mxu0 0.0
        %679 = vmatpush.xpose.msra.mxu0 0.0
        %680 = vmatpush.xpose.msra.mxu0 0.0
        %681 = vmatpush.xpose.msra.mxu0 0.0
        %682 = vmatpush.xpose.msra.mxu0 0.0
        %683 = vmatpush.xpose.msra.mxu0 0.0
        %684 = vmatpush.xpose.msra.mxu0 0.0
        %685 = vmatpush.xpose.msra.mxu0 0.0
        %686 = vmatpush.xpose.msra.mxu0 0.0
        %687 = vmatpush.xpose.msra.mxu0 0.0
        %688 = vmatpush.xpose.msra.mxu0 0.0
        %689 = vmatpush.xpose.msra.mxu0 0.0
        %690 = vmatpush.xpose.msra.mxu0 %v674
        %691 = vmatpush.xpose.msra.mxu0 %v671
        %692 = vmatmul.f32.gmra.mxu0 %v665
        %v693 = vpop.f32.mrf.mxu0
        %v694 = vadd.f32 0.0, %v693
        %695 = vmatmul.f32.gmra.mxu0 %v668
        %v696 = vpop.f32.mrf.mxu0
        %v697 = vadd.f32 0.0, %v696
        %698 = vdwg.mxu0
        %vm699 = vcmp.eq.f32.partialorder %v530, 0.0
        %vm700 = vcmp.eq.f32.partialorder %v531, 0.0
        %v701 = vsel %vm699, -1e+10, %v694
        %v702 = vsel %vm700, -1e+10, %v697
        %vm703 = vcmask 130048
        %v704 = vsel %vm703, %v701, -inf
        %705 = vmax.xlane.f32.xlu0 %v704
        %v706 = vpop.xlane.xlu0 %705
        %v707 = vsel %vm703, %v702, -inf
        %708 = vmax.xlane.f32.xlu0 %v707
        %v709 = vpop.xlane.xlu0 %708
        %v710 = vsub.f32 %v701, %v706
        %v711 = vsub.f32 %v702, %v709
        %v712 = vmul.f32 %v710, 1.442695
        %v713 = vpow.pop %v712
        %v714 = vmul.f32 %v711, 1.442695
        %v715 = vpow.pop %v714
        %v716 = vsel %vm703, %v713, 0.0
        %717 = vadd.xlane.f32.xlu0 %v716
        %v718 = vpop.xlane.xlu0 %717
        %v719 = vsel %vm703, %v715, 0.0
        %720 = vadd.xlane.f32.xlu0 %v719
        %v721 = vpop.xlane.xlu0 %720
        %v722 = vrcp.pop %v718
        %v723 = vrcp.pop %v721
        %v724 = vmul.f32 %v713, %v722
        %v725 = vmul.f32 %v715, %v723
        %v727 = vsel %vm703, %v724, 0
        %v730 = vsel %vm703, %v725, 0
        %732 = vmatpush.msra.mxu0 0.0
        %733 = vmatpush.msra.mxu0 0.0
        %734 = vmatpush.msra.mxu0 0.0
        %735 = vmatpush.msra.mxu0 0.0
        %736 = vmatpush.msra.mxu0 0.0
        %737 = vmatpush.msra.mxu0 0.0
        %738 = vmatpush.msra.mxu0 0.0
        %739 = vmatpush.msra.mxu0 0.0
        %740 = vmatpush.msra.mxu0 0.0
        %741 = vmatpush.msra.mxu0 0.0
        %742 = vmatpush.msra.mxu0 0.0
        %743 = vmatpush.msra.mxu0 0.0
        %744 = vmatpush.msra.mxu0 0.0
        %745 = vmatpush.msra.mxu0 0.0
        %746 = vmatpush.msra.mxu0 %v661
        %747 = vmatpush.msra.mxu0 %v658
        %748 = vmatmul.f32.gmra.mxu0 %v727
        %v749 = vpop.f32.mrf.mxu0
        %v750 = vadd.f32 0.0, %v749
        %751 = vmatmul.f32.gmra.mxu0 %v730
        %v752 = vpop.f32.mrf.mxu0
        %v753 = vadd.f32 0.0, %v752
        %754 = vdwg.mxu0
        %v755 = vld [vmem:[%s9] sm:$0xff]
        %v756 = vld [vmem:[%s9 + $0x8] sm:$0xff]
        %v757 = vld [vmem:[%s9 + $0x10] sm:$0xff]
        %v758 = vld [vmem:[%s9 + $0x18] sm:$0xff]
        %s759 = scalar_lea.vmem %s3, 128
        %v760 = vld [vmem:[%s759] sm:$0xff]
        %v761 = vld [vmem:[%s759 + $0x8] sm:$0xff]
        %v762 = vld [vmem:[%s759 + $0x10] sm:$0xff]
        %v763 = vld [vmem:[%s759 + $0x18] sm:$0xff]
        %v764 = vld [vmem:[%s759 + $0x20] sm:$0xff]
        %v765 = vld [vmem:[%s759 + $0x28] sm:$0xff]
        %v766 = vld [vmem:[%s759 + $0x30] sm:$0xff]
        %v767 = vld [vmem:[%s759 + $0x38] sm:$0xff]
        %v768 = vld [vmem:[%s759 + $0x40] sm:$0xff]
        %v769 = vld [vmem:[%s759 + $0x48] sm:$0xff]
        %v770 = vld [vmem:[%s759 + $0x50] sm:$0xff]
        %v771 = vld [vmem:[%s759 + $0x58] sm:$0xff]
        %v772 = vld [vmem:[%s759 + $0x60] sm:$0xff]
        %v773 = vld [vmem:[%s759 + $0x68] sm:$0xff]
        %v774 = vld [vmem:[%s759 + $0x70] sm:$0xff]
        %v775 = vld [vmem:[%s759 + $0x78] sm:$0xff]
        %s776 = scalar_lea.vmem %s4, 1
        %v777 = vld [vmem:[%s776] sm:$0x1]
        %v779 = vperm.slane %v777, 0
        %781 = vmatpush.msra.mxu0 %v775
        %782 = vmatpush.msra.mxu0 %v774
        %783 = vmatpush.msra.mxu0 %v773
        %784 = vmatpush.msra.mxu0 %v772
        %785 = vmatpush.msra.mxu0 %v771
        %786 = vmatpush.msra.mxu0 %v770
        %787 = vmatpush.msra.mxu0 %v769
        %788 = vmatpush.msra.mxu0 %v768
        %789 = vmatpush.msra.mxu0 %v767
        %790 = vmatpush.msra.mxu0 %v766
        %791 = vmatpush.msra.mxu0 %v765
        %792 = vmatpush.msra.mxu0 %v764
        %793 = vmatpush.msra.mxu0 %v763
        %794 = vmatpush.msra.mxu0 %v762
        %795 = vmatpush.msra.mxu0 %v761
        %796 = vmatpush.msra.mxu0 %v760
        %797 = vmatmul.f32.gmra.mxu0 %v526
        %v798 = vpop.f32.mrf.mxu0
        %v799 = vadd.f32 %v779, %v798
        %800 = vmatmul.f32.gmra.mxu0 %v527
        %v801 = vpop.f32.mrf.mxu0
        %v802 = vadd.f32 %v779, %v801
        %803 = vdwg.mxu0
        %v804 = vmul.f32 %v799, 0.17677669
        %v805 = vmul.f32 %v802, 0.17677669
        %s806 = scalar_lea.vmem %s5, 128
        %v807 = vld [vmem:[%s806] sm:$0xff]
        %v808 = vld [vmem:[%s806 + $0x8] sm:$0xff]
        %v809 = vld [vmem:[%s806 + $0x10] sm:$0xff]
        %v810 = vld [vmem:[%s806 + $0x18] sm:$0xff]
        %v811 = vld [vmem:[%s806 + $0x20] sm:$0xff]
        %v812 = vld [vmem:[%s806 + $0x28] sm:$0xff]
        %v813 = vld [vmem:[%s806 + $0x30] sm:$0xff]
        %v814 = vld [vmem:[%s806 + $0x38] sm:$0xff]
        %v815 = vld [vmem:[%s806 + $0x40] sm:$0xff]
        %v816 = vld [vmem:[%s806 + $0x48] sm:$0xff]
        %v817 = vld [vmem:[%s806 + $0x50] sm:$0xff]
        %v818 = vld [vmem:[%s806 + $0x58] sm:$0xff]
        %v819 = vld [vmem:[%s806 + $0x60] sm:$0xff]
        %v820 = vld [vmem:[%s806 + $0x68] sm:$0xff]
        %v821 = vld [vmem:[%s806 + $0x70] sm:$0xff]
        %v822 = vld [vmem:[%s806 + $0x78] sm:$0xff]
        %s823 = scalar_lea.vmem %s6, 1
        %v824 = vld [vmem:[%s823] sm:$0x1]
        %v826 = vperm.slane %v824, 0
        %828 = vmatpush.msra.mxu0 %v822
        %829 = vmatpush.msra.mxu0 %v821
        %830 = vmatpush.msra.mxu0 %v820
        %831 = vmatpush.msra.mxu0 %v819
        %832 = vmatpush.msra.mxu0 %v818
        %833 = vmatpush.msra.mxu0 %v817
        %834 = vmatpush.msra.mxu0 %v816
        %835 = vmatpush.msra.mxu0 %v815
        %836 = vmatpush.msra.mxu0 %v814
        %837 = vmatpush.msra.mxu0 %v813
        %838 = vmatpush.msra.mxu0 %v812
        %839 = vmatpush.msra.mxu0 %v811
        %840 = vmatpush.msra.mxu0 %v810
        %841 = vmatpush.msra.mxu0 %v809
        %842 = vmatpush.msra.mxu0 %v808
        %843 = vmatpush.msra.mxu0 %v807
        %844 = vmatmul.f32.gmra.mxu0 %v528
        %v845 = vpop.f32.mrf.mxu0
        %v846 = vadd.f32 %v826, %v845
        %847 = vmatmul.f32.gmra.mxu0 %v529
        %v848 = vpop.f32.mrf.mxu0
        %v849 = vadd.f32 %v826, %v848
        %850 = vdwg.mxu0
        %s851 = scalar_lea.vmem %s7, 128
        %v852 = vld [vmem:[%s851] sm:$0xff]
        %v853 = vld [vmem:[%s851 + $0x8] sm:$0xff]
        %v854 = vld [vmem:[%s851 + $0x10] sm:$0xff]
        %v855 = vld [vmem:[%s851 + $0x18] sm:$0xff]
        %v856 = vld [vmem:[%s851 + $0x20] sm:$0xff]
        %v857 = vld [vmem:[%s851 + $0x28] sm:$0xff]
        %v858 = vld [vmem:[%s851 + $0x30] sm:$0xff]
        %v859 = vld [vmem:[%s851 + $0x38] sm:$0xff]
        %v860 = vld [vmem:[%s851 + $0x40] sm:$0xff]
        %v861 = vld [vmem:[%s851 + $0x48] sm:$0xff]
        %v862 = vld [vmem:[%s851 + $0x50] sm:$0xff]
        %v863 = vld [vmem:[%s851 + $0x58] sm:$0xff]
        %v864 = vld [vmem:[%s851 + $0x60] sm:$0xff]
        %v865 = vld [vmem:[%s851 + $0x68] sm:$0xff]
        %v866 = vld [vmem:[%s851 + $0x70] sm:$0xff]
        %v867 = vld [vmem:[%s851 + $0x78] sm:$0xff]
        %s868 = scalar_lea.vmem %s8, 1
        %v869 = vld [vmem:[%s868] sm:$0x1]
        %v871 = vperm.slane %v869, 0
        %873 = vmatpush.msra.mxu0 %v867
        %874 = vmatpush.msra.mxu0 %v866
        %875 = vmatpush.msra.mxu0 %v865
        %876 = vmatpush.msra.mxu0 %v864
        %877 = vmatpush.msra.mxu0 %v863
        %878 = vmatpush.msra.mxu0 %v862
        %879 = vmatpush.msra.mxu0 %v861
        %880 = vmatpush.msra.mxu0 %v860
        %881 = vmatpush.msra.mxu0 %v859
        %882 = vmatpush.msra.mxu0 %v858
        %883 = vmatpush.msra.mxu0 %v857
        %884 = vmatpush.msra.mxu0 %v856
        %885 = vmatpush.msra.mxu0 %v855
        %886 = vmatpush.msra.mxu0 %v854
        %887 = vmatpush.msra.mxu0 %v853
        %888 = vmatpush.msra.mxu0 %v852
        %889 = vmatmul.f32.gmra.mxu0 %v528
        %v890 = vpop.f32.mrf.mxu0
        %v891 = vadd.f32 %v871, %v890
        %892 = vmatmul.f32.gmra.mxu0 %v529
        %v893 = vpop.f32.mrf.mxu0
        %v894 = vadd.f32 %v871, %v893
        %895 = vdwg.mxu0
        %v897 = vsel %vm663, %v804, 0
        %v900 = vsel %vm663, %v805, 0
        %v903 = vsel %vm663, %v846, 0
        %v906 = vsel %vm663, %v849, 0
        %908 = vmatpush.xpose.msra.mxu0 0.0
        %909 = vmatpush.xpose.msra.mxu0 0.0
        %910 = vmatpush.xpose.msra.mxu0 0.0
        %911 = vmatpush.xpose.msra.mxu0 0.0
        %912 = vmatpush.xpose.msra.mxu0 0.0
        %913 = vmatpush.xpose.msra.mxu0 0.0
        %914 = vmatpush.xpose.msra.mxu0 0.0
        %915 = vmatpush.xpose.msra.mxu0 0.0
        %916 = vmatpush.xpose.msra.mxu0 0.0
        %917 = vmatpush.xpose.msra.mxu0 0.0
        %918 = vmatpush.xpose.msra.mxu0 0.0
        %919 = vmatpush.xpose.msra.mxu0 0.0
        %920 = vmatpush.xpose.msra.mxu0 0.0
        %921 = vmatpush.xpose.msra.mxu0 0.0
        %922 = vmatpush.xpose.msra.mxu0 %v906
        %923 = vmatpush.xpose.msra.mxu0 %v903
        %924 = vmatmul.f32.gmra.mxu0 %v897
        %v925 = vpop.f32.mrf.mxu0
        %v926 = vadd.f32 0.0, %v925
        %927 = vmatmul.f32.gmra.mxu0 %v900
        %v928 = vpop.f32.mrf.mxu0
        %v929 = vadd.f32 0.0, %v928
        %930 = vdwg.mxu0
        %v931 = vsel %vm699, -1e+10, %v926
        %v932 = vsel %vm700, -1e+10, %v929
        %v933 = vsel %vm703, %v931, -inf
        %934 = vmax.xlane.f32.xlu0 %v933
        %v935 = vpop.xlane.xlu0 %934
        %v936 = vsel %vm703, %v932, -inf
        %937 = vmax.xlane.f32.xlu0 %v936
        %v938 = vpop.xlane.xlu0 %937
        %v939 = vsub.f32 %v931, %v935
        %v940 = vsub.f32 %v932, %v938
        %v941 = vmul.f32 %v939, 1.442695
        %v942 = vpow.pop %v941
        %v943 = vmul.f32 %v940, 1.442695
        %v944 = vpow.pop %v943
        %v945 = vsel %vm703, %v942, 0.0
        %946 = vadd.xlane.f32.xlu0 %v945
        %v947 = vpop.xlane.xlu0 %946
        %v948 = vsel %vm703, %v944, 0.0
        %949 = vadd.xlane.f32.xlu0 %v948
        %v950 = vpop.xlane.xlu0 %949
        %v951 = vrcp.pop %v947
        %v952 = vrcp.pop %v950
        %v953 = vmul.f32 %v942, %v951
        %v954 = vmul.f32 %v944, %v952
        %v956 = vsel %vm703, %v953, 0
        %v959 = vsel %vm703, %v954, 0
        %961 = vmatpush.msra.mxu0 0.0
        %962 = vmatpush.msra.mxu0 0.0
        %963 = vmatpush.msra.mxu0 0.0
        %964 = vmatpush.msra.mxu0 0.0
        %965 = vmatpush.msra.mxu0 0.0
        %966 = vmatpush.msra.mxu0 0.0
        %967 = vmatpush.msra.mxu0 0.0
        %968 = vmatpush.msra.mxu0 0.0
        %969 = vmatpush.msra.mxu0 0.0
        %970 = vmatpush.msra.mxu0 0.0
        %971 = vmatpush.msra.mxu0 0.0
        %972 = vmatpush.msra.mxu0 0.0
        %973 = vmatpush.msra.mxu0 0.0
        %974 = vmatpush.msra.mxu0 0.0
        %975 = vmatpush.msra.mxu0 %v894
        %976 = vmatpush.msra.mxu0 %v891
        %977 = vmatmul.f32.gmra.mxu0 %v956
        %v978 = vpop.f32.mrf.mxu0
        %v979 = vadd.f32 0.0, %v978
        %980 = vmatmul.f32.gmra.mxu0 %v959
        %v981 = vpop.f32.mrf.mxu0
        %v982 = vadd.f32 0.0, %v981
        %983 = vdwg.mxu0
        %s984 = scalar_lea.vmem %s9, 32
        %v985 = vld [vmem:[%s984] sm:$0xff]
        %v986 = vld [vmem:[%s984 + $0x8] sm:$0xff]
        %v987 = vld [vmem:[%s984 + $0x10] sm:$0xff]
        %v988 = vld [vmem:[%s984 + $0x18] sm:$0xff]
        %v990 = vsel %vm663, %v979, 0
        %v993 = vsel %vm663, %v982, 0
        %995 = vmatpush.msra.mxu0 0.0
        %996 = vmatpush.msra.mxu0 0.0
        %997 = vmatpush.msra.mxu0 0.0
        %998 = vmatpush.msra.mxu0 0.0
        %999 = vmatpush.msra.mxu0 0.0
        %1000 = vmatpush.msra.mxu0 0.0
        %1001 = vmatpush.msra.mxu0 0.0
        %1002 = vmatpush.msra.mxu0 0.0
        %1003 = vmatpush.msra.mxu0 0.0
        %1004 = vmatpush.msra.mxu0 0.0
        %1005 = vmatpush.msra.mxu0 0.0
        %1006 = vmatpush.msra.mxu0 0.0
        %1007 = vmatpush.msra.mxu0 %v988
        %1008 = vmatpush.msra.mxu0 %v987
        %1009 = vmatpush.msra.mxu0 %v986
        %1010 = vmatpush.msra.mxu0 %v985
        %1011 = vmatmul.f32.gmra.mxu0 %v990
        %v1012 = vpop.f32.mrf.mxu0
        %v1013 = vadd.f32 0.0, %v1012
        %1014 = vmatmul.f32.gmra.mxu0 %v993
        %v1015 = vpop.f32.mrf.mxu0
        %v1016 = vadd.f32 0.0, %v1015
        %1017 = vdwg.mxu0
        %v1019 = vsel %vm663, %v750, 0
        %v1022 = vsel %vm663, %v753, 0
        %1024 = vmatpush.msra.mxu0 0.0
        %1025 = vmatpush.msra.mxu0 0.0
        %1026 = vmatpush.msra.mxu0 0.0
        %1027 = vmatpush.msra.mxu0 0.0
        %1028 = vmatpush.msra.mxu0 0.0
        %1029 = vmatpush.msra.mxu0 0.0
        %1030 = vmatpush.msra.mxu0 0.0
        %1031 = vmatpush.msra.mxu0 0.0
        %1032 = vmatpush.msra.mxu0 0.0
        %1033 = vmatpush.msra.mxu0 0.0
        %1034 = vmatpush.msra.mxu0 0.0
        %1035 = vmatpush.msra.mxu0 0.0
        %1036 = vmatpush.msra.mxu0 %v758
        %1037 = vmatpush.msra.mxu0 %v757
        %1038 = vmatpush.msra.mxu0 %v756
        %1039 = vmatpush.msra.mxu0 %v755
        %1040 = vmatmul.f32.gmra.mxu0 %v1019
        %v1041 = vpop.f32.mrf.mxu0
        %v1042 = vadd.f32 %v1013, %v1041
        %1043 = vmatmul.f32.gmra.mxu0 %v1022
        %v1044 = vpop.f32.mrf.mxu0
        %v1045 = vadd.f32 %v1016, %v1044
        %1046 = vdwg.mxu0
        %s1047 = scalar_lea.vmem %s3, 256
        %v1048 = vld [vmem:[%s1047] sm:$0xff]
        %v1049 = vld [vmem:[%s1047 + $0x8] sm:$0xff]
        %v1050 = vld [vmem:[%s1047 + $0x10] sm:$0xff]
        %v1051 = vld [vmem:[%s1047 + $0x18] sm:$0xff]
        %v1052 = vld [vmem:[%s1047 + $0x20] sm:$0xff]
        %v1053 = vld [vmem:[%s1047 + $0x28] sm:$0xff]
        %v1054 = vld [vmem:[%s1047 + $0x30] sm:$0xff]
        %v1055 = vld [vmem:[%s1047 + $0x38] sm:$0xff]
        %v1056 = vld [vmem:[%s1047 + $0x40] sm:$0xff]
        %v1057 = vld [vmem:[%s1047 + $0x48] sm:$0xff]
        %v1058 = vld [vmem:[%s1047 + $0x50] sm:$0xff]
        %v1059 = vld [vmem:[%s1047 + $0x58] sm:$0xff]
        %v1060 = vld [vmem:[%s1047 + $0x60] sm:$0xff]
        %v1061 = vld [vmem:[%s1047 + $0x68] sm:$0xff]
        %v1062 = vld [vmem:[%s1047 + $0x70] sm:$0xff]
        %v1063 = vld [vmem:[%s1047 + $0x78] sm:$0xff]
        %s1064 = scalar_lea.vmem %s4, 2
        %v1065 = vld [vmem:[%s1064] sm:$0x1]
        %v1067 = vperm.slane %v1065, 0
        %1069 = vmatpush.msra.mxu0 %v1063
        %1070 = vmatpush.msra.mxu0 %v1062
        %1071 = vmatpush.msra.mxu0 %v1061
        %1072 = vmatpush.msra.mxu0 %v1060
        %1073 = vmatpush.msra.mxu0 %v1059
        %1074 = vmatpush.msra.mxu0 %v1058
        %1075 = vmatpush.msra.mxu0 %v1057
        %1076 = vmatpush.msra.mxu0 %v1056
        %1077 = vmatpush.msra.mxu0 %v1055
        %1078 = vmatpush.msra.mxu0 %v1054
        %1079 = vmatpush.msra.mxu0 %v1053
        %1080 = vmatpush.msra.mxu0 %v1052
        %1081 = vmatpush.msra.mxu0 %v1051
        %1082 = vmatpush.msra.mxu0 %v1050
        %1083 = vmatpush.msra.mxu0 %v1049
        %1084 = vmatpush.msra.mxu0 %v1048
        %1085 = vmatmul.f32.gmra.mxu0 %v526
        %v1086 = vpop.f32.mrf.mxu0
        %v1087 = vadd.f32 %v1067, %v1086
        %1088 = vmatmul.f32.gmra.mxu0 %v527
        %v1089 = vpop.f32.mrf.mxu0
        %v1090 = vadd.f32 %v1067, %v1089
        %1091 = vdwg.mxu0
        %v1092 = vmul.f32 %v1087, 0.17677669
        %v1093 = vmul.f32 %v1090, 0.17677669
        %s1094 = scalar_lea.vmem %s5, 256
        %v1095 = vld [vmem:[%s1094] sm:$0xff]
        %v1096 = vld [vmem:[%s1094 + $0x8] sm:$0xff]
        %v1097 = vld [vmem:[%s1094 + $0x10] sm:$0xff]
        %v1098 = vld [vmem:[%s1094 + $0x18] sm:$0xff]
        %v1099 = vld [vmem:[%s1094 + $0x20] sm:$0xff]
        %v1100 = vld [vmem:[%s1094 + $0x28] sm:$0xff]
        %v1101 = vld [vmem:[%s1094 + $0x30] sm:$0xff]
        %v1102 = vld [vmem:[%s1094 + $0x38] sm:$0xff]
        %v1103 = vld [vmem:[%s1094 + $0x40] sm:$0xff]
        %v1104 = vld [vmem:[%s1094 + $0x48] sm:$0xff]
        %v1105 = vld [vmem:[%s1094 + $0x50] sm:$0xff]
        %v1106 = vld [vmem:[%s1094 + $0x58] sm:$0xff]
        %v1107 = vld [vmem:[%s1094 + $0x60] sm:$0xff]
        %v1108 = vld [vmem:[%s1094 + $0x68] sm:$0xff]
        %v1109 = vld [vmem:[%s1094 + $0x70] sm:$0xff]
        %v1110 = vld [vmem:[%s1094 + $0x78] sm:$0xff]
        %s1111 = scalar_lea.vmem %s6, 2
        %v1112 = vld [vmem:[%s1111] sm:$0x1]
        %v1114 = vperm.slane %v1112, 0
        %1116 = vmatpush.msra.mxu0 %v1110
        %1117 = vmatpush.msra.mxu0 %v1109
        %1118 = vmatpush.msra.mxu0 %v1108
        %1119 = vmatpush.msra.mxu0 %v1107
        %1120 = vmatpush.msra.mxu0 %v1106
        %1121 = vmatpush.msra.mxu0 %v1105
        %1122 = vmatpush.msra.mxu0 %v1104
        %1123 = vmatpush.msra.mxu0 %v1103
        %1124 = vmatpush.msra.mxu0 %v1102
        %1125 = vmatpush.msra.mxu0 %v1101
        %1126 = vmatpush.msra.mxu0 %v1100
        %1127 = vmatpush.msra.mxu0 %v1099
        %1128 = vmatpush.msra.mxu0 %v1098
        %1129 = vmatpush.msra.mxu0 %v1097
        %1130 = vmatpush.msra.mxu0 %v1096
        %1131 = vmatpush.msra.mxu0 %v1095
        %1132 = vmatmul.f32.gmra.mxu0 %v528
        %v1133 = vpop.f32.mrf.mxu0
        %v1134 = vadd.f32 %v1114, %v1133
        %1135 = vmatmul.f32.gmra.mxu0 %v529
        %v1136 = vpop.f32.mrf.mxu0
        %v1137 = vadd.f32 %v1114, %v1136
        %1138 = vdwg.mxu0
        %s1139 = scalar_lea.vmem %s7, 256
        %v1140 = vld [vmem:[%s1139] sm:$0xff]
        %v1141 = vld [vmem:[%s1139 + $0x8] sm:$0xff]
        %v1142 = vld [vmem:[%s1139 + $0x10] sm:$0xff]
        %v1143 = vld [vmem:[%s1139 + $0x18] sm:$0xff]
        %v1144 = vld [vmem:[%s1139 + $0x20] sm:$0xff]
        %v1145 = vld [vmem:[%s1139 + $0x28] sm:$0xff]
        %v1146 = vld [vmem:[%s1139 + $0x30] sm:$0xff]
        %v1147 = vld [vmem:[%s1139 + $0x38] sm:$0xff]
        %v1148 = vld [vmem:[%s1139 + $0x40] sm:$0xff]
        %v1149 = vld [vmem:[%s1139 + $0x48] sm:$0xff]
        %v1150 = vld [vmem:[%s1139 + $0x50] sm:$0xff]
        %v1151 = vld [vmem:[%s1139 + $0x58] sm:$0xff]
        %v1152 = vld [vmem:[%s1139 + $0x60] sm:$0xff]
        %v1153 = vld [vmem:[%s1139 + $0x68] sm:$0xff]
        %v1154 = vld [vmem:[%s1139 + $0x70] sm:$0xff]
        %v1155 = vld [vmem:[%s1139 + $0x78] sm:$0xff]
        %s1156 = scalar_lea.vmem %s8, 2
        %v1157 = vld [vmem:[%s1156] sm:$0x1]
        %v1159 = vperm.slane %v1157, 0
        %1161 = vmatpush.msra.mxu0 %v1155
        %1162 = vmatpush.msra.mxu0 %v1154
        %1163 = vmatpush.msra.mxu0 %v1153
        %1164 = vmatpush.msra.mxu0 %v1152
        %1165 = vmatpush.msra.mxu0 %v1151
        %1166 = vmatpush.msra.mxu0 %v1150
        %1167 = vmatpush.msra.mxu0 %v1149
        %1168 = vmatpush.msra.mxu0 %v1148
        %1169 = vmatpush.msra.mxu0 %v1147
        %1170 = vmatpush.msra.mxu0 %v1146
        %1171 = vmatpush.msra.mxu0 %v1145
        %1172 = vmatpush.msra.mxu0 %v1144
        %1173 = vmatpush.msra.mxu0 %v1143
        %1174 = vmatpush.msra.mxu0 %v1142
        %1175 = vmatpush.msra.mxu0 %v1141
        %1176 = vmatpush.msra.mxu0 %v1140
        %1177 = vmatmul.f32.gmra.mxu0 %v528
        %v1178 = vpop.f32.mrf.mxu0
        %v1179 = vadd.f32 %v1159, %v1178
        %1180 = vmatmul.f32.gmra.mxu0 %v529
        %v1181 = vpop.f32.mrf.mxu0
        %v1182 = vadd.f32 %v1159, %v1181
        %1183 = vdwg.mxu0
        %v1185 = vsel %vm663, %v1092, 0
        %v1188 = vsel %vm663, %v1093, 0
        %v1191 = vsel %vm663, %v1134, 0
        %v1194 = vsel %vm663, %v1137, 0
        %1196 = vmatpush.xpose.msra.mxu0 0.0
        %1197 = vmatpush.xpose.msra.mxu0 0.0
        %1198 = vmatpush.xpose.msra.mxu0 0.0
        %1199 = vmatpush.xpose.msra.mxu0 0.0
        %1200 = vmatpush.xpose.msra.mxu0 0.0
        %1201 = vmatpush.xpose.msra.mxu0 0.0
        %1202 = vmatpush.xpose.msra.mxu0 0.0
        %1203 = vmatpush.xpose.msra.mxu0 0.0
        %1204 = vmatpush.xpose.msra.mxu0 0.0
        %1205 = vmatpush.xpose.msra.mxu0 0.0
        %1206 = vmatpush.xpose.msra.mxu0 0.0
        %1207 = vmatpush.xpose.msra.mxu0 0.0
        %1208 = vmatpush.xpose.msra.mxu0 0.0
        %1209 = vmatpush.xpose.msra.mxu0 0.0
        %1210 = vmatpush.xpose.msra.mxu0 %v1194
        %1211 = vmatpush.xpose.msra.mxu0 %v1191
        %1212 = vmatmul.f32.gmra.mxu0 %v1185
        %v1213 = vpop.f32.mrf.mxu0
        %v1214 = vadd.f32 0.0, %v1213
        %1215 = vmatmul.f32.gmra.mxu0 %v1188
        %v1216 = vpop.f32.mrf.mxu0
        %v1217 = vadd.f32 0.0, %v1216
        %1218 = vdwg.mxu0
        %v1219 = vsel %vm699, -1e+10, %v1214
        %v1220 = vsel %vm700, -1e+10, %v1217
        %v1221 = vsel %vm703, %v1219, -inf
        %1222 = vmax.xlane.f32.xlu0 %v1221
        %v1223 = vpop.xlane.xlu0 %1222
        %v1224 = vsel %vm703, %v1220, -inf
        %1225 = vmax.xlane.f32.xlu0 %v1224
        %v1226 = vpop.xlane.xlu0 %1225
        %v1227 = vsub.f32 %v1219, %v1223
        %v1228 = vsub.f32 %v1220, %v1226
        %v1229 = vmul.f32 %v1227, 1.442695
        %v1230 = vpow.pop %v1229
        %v1231 = vmul.f32 %v1228, 1.442695
        %v1232 = vpow.pop %v1231
        %v1233 = vsel %vm703, %v1230, 0.0
        %1234 = vadd.xlane.f32.xlu0 %v1233
        %v1235 = vpop.xlane.xlu0 %1234
        %v1236 = vsel %vm703, %v1232, 0.0
        %1237 = vadd.xlane.f32.xlu0 %v1236
        %v1238 = vpop.xlane.xlu0 %1237
        %v1239 = vrcp.pop %v1235
        %v1240 = vrcp.pop %v1238
        %v1241 = vmul.f32 %v1230, %v1239
        %v1242 = vmul.f32 %v1232, %v1240
        %v1244 = vsel %vm703, %v1241, 0
        %v1247 = vsel %vm703, %v1242, 0
        %1249 = vmatpush.msra.mxu0 0.0
        %1250 = vmatpush.msra.mxu0 0.0
        %1251 = vmatpush.msra.mxu0 0.0
        %1252 = vmatpush.msra.mxu0 0.0
        %1253 = vmatpush.msra.mxu0 0.0
        %1254 = vmatpush.msra.mxu0 0.0
        %1255 = vmatpush.msra.mxu0 0.0
        %1256 = vmatpush.msra.mxu0 0.0
        %1257 = vmatpush.msra.mxu0 0.0
        %1258 = vmatpush.msra.mxu0 0.0
        %1259 = vmatpush.msra.mxu0 0.0
        %1260 = vmatpush.msra.mxu0 0.0
        %1261 = vmatpush.msra.mxu0 0.0
        %1262 = vmatpush.msra.mxu0 0.0
        %1263 = vmatpush.msra.mxu0 %v1182
        %1264 = vmatpush.msra.mxu0 %v1179
        %1265 = vmatmul.f32.gmra.mxu0 %v1244
        %v1266 = vpop.f32.mrf.mxu0
        %v1267 = vadd.f32 0.0, %v1266
        %1268 = vmatmul.f32.gmra.mxu0 %v1247
        %v1269 = vpop.f32.mrf.mxu0
        %v1270 = vadd.f32 0.0, %v1269
        %1271 = vdwg.mxu0
        %s1272 = scalar_lea.vmem %s9, 64
        %v1273 = vld [vmem:[%s1272] sm:$0xff]
        %v1274 = vld [vmem:[%s1272 + $0x8] sm:$0xff]
        %v1275 = vld [vmem:[%s1272 + $0x10] sm:$0xff]
        %v1276 = vld [vmem:[%s1272 + $0x18] sm:$0xff]
        %v1278 = vsel %vm663, %v1267, 0
        %v1281 = vsel %vm663, %v1270, 0
        %1283 = vmatpush.msra.mxu0 0.0
        %1284 = vmatpush.msra.mxu0 0.0
        %1285 = vmatpush.msra.mxu0 0.0
        %1286 = vmatpush.msra.mxu0 0.0
        %1287 = vmatpush.msra.mxu0 0.0
        %1288 = vmatpush.msra.mxu0 0.0
        %1289 = vmatpush.msra.mxu0 0.0
        %1290 = vmatpush.msra.mxu0 0.0
        %1291 = vmatpush.msra.mxu0 0.0
        %1292 = vmatpush.msra.mxu0 0.0
        %1293 = vmatpush.msra.mxu0 0.0
        %1294 = vmatpush.msra.mxu0 0.0
        %1295 = vmatpush.msra.mxu0 %v1276
        %1296 = vmatpush.msra.mxu0 %v1275
        %1297 = vmatpush.msra.mxu0 %v1274
        %1298 = vmatpush.msra.mxu0 %v1273
        %1299 = vmatmul.f32.gmra.mxu0 %v1278
        %v1300 = vpop.f32.mrf.mxu0
        %v1301 = vadd.f32 0.0, %v1300
        %1302 = vmatmul.f32.gmra.mxu0 %v1281
        %v1303 = vpop.f32.mrf.mxu0
        %v1304 = vadd.f32 0.0, %v1303
        %1305 = vdwg.mxu0
        %v1306 = vadd.f32 %v1042, %v1301
        %v1307 = vadd.f32 %v1045, %v1304
        %s1308 = scalar_lea.vmem %s3, 384
        %v1309 = vld [vmem:[%s1308] sm:$0xff]
        %v1310 = vld [vmem:[%s1308 + $0x8] sm:$0xff]
        %v1311 = vld [vmem:[%s1308 + $0x10] sm:$0xff]
        %v1312 = vld [vmem:[%s1308 + $0x18] sm:$0xff]
        %v1313 = vld [vmem:[%s1308 + $0x20] sm:$0xff]
        %v1314 = vld [vmem:[%s1308 + $0x28] sm:$0xff]
        %v1315 = vld [vmem:[%s1308 + $0x30] sm:$0xff]
        %v1316 = vld [vmem:[%s1308 + $0x38] sm:$0xff]
        %v1317 = vld [vmem:[%s1308 + $0x40] sm:$0xff]
        %v1318 = vld [vmem:[%s1308 + $0x48] sm:$0xff]
        %v1319 = vld [vmem:[%s1308 + $0x50] sm:$0xff]
        %v1320 = vld [vmem:[%s1308 + $0x58] sm:$0xff]
        %v1321 = vld [vmem:[%s1308 + $0x60] sm:$0xff]
        %v1322 = vld [vmem:[%s1308 + $0x68] sm:$0xff]
        %v1323 = vld [vmem:[%s1308 + $0x70] sm:$0xff]
        %v1324 = vld [vmem:[%s1308 + $0x78] sm:$0xff]
        %s1325 = scalar_lea.vmem %s4, 3
        %v1326 = vld [vmem:[%s1325] sm:$0x1]
        %v1328 = vperm.slane %v1326, 0
        %1330 = vmatpush.msra.mxu0 %v1324
        %1331 = vmatpush.msra.mxu0 %v1323
        %1332 = vmatpush.msra.mxu0 %v1322
        %1333 = vmatpush.msra.mxu0 %v1321
        %1334 = vmatpush.msra.mxu0 %v1320
        %1335 = vmatpush.msra.mxu0 %v1319
        %1336 = vmatpush.msra.mxu0 %v1318
        %1337 = vmatpush.msra.mxu0 %v1317
        %1338 = vmatpush.msra.mxu0 %v1316
        %1339 = vmatpush.msra.mxu0 %v1315
        %1340 = vmatpush.msra.mxu0 %v1314
        %1341 = vmatpush.msra.mxu0 %v1313
        %1342 = vmatpush.msra.mxu0 %v1312
        %1343 = vmatpush.msra.mxu0 %v1311
        %1344 = vmatpush.msra.mxu0 %v1310
        %1345 = vmatpush.msra.mxu0 %v1309
        %1346 = vmatmul.f32.gmra.mxu0 %v526
        %v1347 = vpop.f32.mrf.mxu0
        %v1348 = vadd.f32 %v1328, %v1347
        %1349 = vmatmul.f32.gmra.mxu0 %v527
        %v1350 = vpop.f32.mrf.mxu0
        %v1351 = vadd.f32 %v1328, %v1350
        %1352 = vdwg.mxu0
        %v1353 = vmul.f32 %v1348, 0.17677669
        %v1354 = vmul.f32 %v1351, 0.17677669
        %s1355 = scalar_lea.vmem %s5, 384
        %v1356 = vld [vmem:[%s1355] sm:$0xff]
        %v1357 = vld [vmem:[%s1355 + $0x8] sm:$0xff]
        %v1358 = vld [vmem:[%s1355 + $0x10] sm:$0xff]
        %v1359 = vld [vmem:[%s1355 + $0x18] sm:$0xff]
        %v1360 = vld [vmem:[%s1355 + $0x20] sm:$0xff]
        %v1361 = vld [vmem:[%s1355 + $0x28] sm:$0xff]
        %v1362 = vld [vmem:[%s1355 + $0x30] sm:$0xff]
        %v1363 = vld [vmem:[%s1355 + $0x38] sm:$0xff]
        %v1364 = vld [vmem:[%s1355 + $0x40] sm:$0xff]
        %v1365 = vld [vmem:[%s1355 + $0x48] sm:$0xff]
        %v1366 = vld [vmem:[%s1355 + $0x50] sm:$0xff]
        %v1367 = vld [vmem:[%s1355 + $0x58] sm:$0xff]
        %v1368 = vld [vmem:[%s1355 + $0x60] sm:$0xff]
        %v1369 = vld [vmem:[%s1355 + $0x68] sm:$0xff]
        %v1370 = vld [vmem:[%s1355 + $0x70] sm:$0xff]
        %v1371 = vld [vmem:[%s1355 + $0x78] sm:$0xff]
        %s1372 = scalar_lea.vmem %s6, 3
        %v1373 = vld [vmem:[%s1372] sm:$0x1]
        %v1375 = vperm.slane %v1373, 0
        %1377 = vmatpush.msra.mxu0 %v1371
        %1378 = vmatpush.msra.mxu0 %v1370
        %1379 = vmatpush.msra.mxu0 %v1369
        %1380 = vmatpush.msra.mxu0 %v1368
        %1381 = vmatpush.msra.mxu0 %v1367
        %1382 = vmatpush.msra.mxu0 %v1366
        %1383 = vmatpush.msra.mxu0 %v1365
        %1384 = vmatpush.msra.mxu0 %v1364
        %1385 = vmatpush.msra.mxu0 %v1363
        %1386 = vmatpush.msra.mxu0 %v1362
        %1387 = vmatpush.msra.mxu0 %v1361
        %1388 = vmatpush.msra.mxu0 %v1360
        %1389 = vmatpush.msra.mxu0 %v1359
        %1390 = vmatpush.msra.mxu0 %v1358
        %1391 = vmatpush.msra.mxu0 %v1357
        %1392 = vmatpush.msra.mxu0 %v1356
        %1393 = vmatmul.f32.gmra.mxu0 %v528
        %v1394 = vpop.f32.mrf.mxu0
        %v1395 = vadd.f32 %v1375, %v1394
        %1396 = vmatmul.f32.gmra.mxu0 %v529
        %v1397 = vpop.f32.mrf.mxu0
        %v1398 = vadd.f32 %v1375, %v1397
        %1399 = vdwg.mxu0
        %s1400 = scalar_lea.vmem %s7, 384
        %v1401 = vld [vmem:[%s1400] sm:$0xff]
        %v1402 = vld [vmem:[%s1400 + $0x8] sm:$0xff]
        %v1403 = vld [vmem:[%s1400 + $0x10] sm:$0xff]
        %v1404 = vld [vmem:[%s1400 + $0x18] sm:$0xff]
        %v1405 = vld [vmem:[%s1400 + $0x20] sm:$0xff]
        %v1406 = vld [vmem:[%s1400 + $0x28] sm:$0xff]
        %v1407 = vld [vmem:[%s1400 + $0x30] sm:$0xff]
        %v1408 = vld [vmem:[%s1400 + $0x38] sm:$0xff]
        %v1409 = vld [vmem:[%s1400 + $0x40] sm:$0xff]
        %v1410 = vld [vmem:[%s1400 + $0x48] sm:$0xff]
        %v1411 = vld [vmem:[%s1400 + $0x50] sm:$0xff]
        %v1412 = vld [vmem:[%s1400 + $0x58] sm:$0xff]
        %v1413 = vld [vmem:[%s1400 + $0x60] sm:$0xff]
        %v1414 = vld [vmem:[%s1400 + $0x68] sm:$0xff]
        %v1415 = vld [vmem:[%s1400 + $0x70] sm:$0xff]
        %v1416 = vld [vmem:[%s1400 + $0x78] sm:$0xff]
        %s1417 = scalar_lea.vmem %s8, 3
        %v1418 = vld [vmem:[%s1417] sm:$0x1]
        %v1420 = vperm.slane %v1418, 0
        %1422 = vmatpush.msra.mxu0 %v1416
        %1423 = vmatpush.msra.mxu0 %v1415
        %1424 = vmatpush.msra.mxu0 %v1414
        %1425 = vmatpush.msra.mxu0 %v1413
        %1426 = vmatpush.msra.mxu0 %v1412
        %1427 = vmatpush.msra.mxu0 %v1411
        %1428 = vmatpush.msra.mxu0 %v1410
        %1429 = vmatpush.msra.mxu0 %v1409
        %1430 = vmatpush.msra.mxu0 %v1408
        %1431 = vmatpush.msra.mxu0 %v1407
        %1432 = vmatpush.msra.mxu0 %v1406
        %1433 = vmatpush.msra.mxu0 %v1405
        %1434 = vmatpush.msra.mxu0 %v1404
        %1435 = vmatpush.msra.mxu0 %v1403
        %1436 = vmatpush.msra.mxu0 %v1402
        %1437 = vmatpush.msra.mxu0 %v1401
        %1438 = vmatmul.f32.gmra.mxu0 %v528
        %v1439 = vpop.f32.mrf.mxu0
        %v1440 = vadd.f32 %v1420, %v1439
        %1441 = vmatmul.f32.gmra.mxu0 %v529
        %v1442 = vpop.f32.mrf.mxu0
        %v1443 = vadd.f32 %v1420, %v1442
        %1444 = vdwg.mxu0
        %v1446 = vsel %vm663, %v1353, 0
        %v1449 = vsel %vm663, %v1354, 0
        %v1452 = vsel %vm663, %v1395, 0
        %v1455 = vsel %vm663, %v1398, 0
        %1457 = vmatpush.xpose.msra.mxu0 0.0
        %1458 = vmatpush.xpose.msra.mxu0 0.0
        %1459 = vmatpush.xpose.msra.mxu0 0.0
        %1460 = vmatpush.xpose.msra.mxu0 0.0
        %1461 = vmatpush.xpose.msra.mxu0 0.0
        %1462 = vmatpush.xpose.msra.mxu0 0.0
        %1463 = vmatpush.xpose.msra.mxu0 0.0
        %1464 = vmatpush.xpose.msra.mxu0 0.0
        %1465 = vmatpush.xpose.msra.mxu0 0.0
        %1466 = vmatpush.xpose.msra.mxu0 0.0
        %1467 = vmatpush.xpose.msra.mxu0 0.0
        %1468 = vmatpush.xpose.msra.mxu0 0.0
        %1469 = vmatpush.xpose.msra.mxu0 0.0
        %1470 = vmatpush.xpose.msra.mxu0 0.0
        %1471 = vmatpush.xpose.msra.mxu0 %v1455
        %1472 = vmatpush.xpose.msra.mxu0 %v1452
        %1473 = vmatmul.f32.gmra.mxu0 %v1446
        %v1474 = vpop.f32.mrf.mxu0
        %v1475 = vadd.f32 0.0, %v1474
        %1476 = vmatmul.f32.gmra.mxu0 %v1449
        %v1477 = vpop.f32.mrf.mxu0
        %v1478 = vadd.f32 0.0, %v1477
        %1479 = vdwg.mxu0
        %v1480 = vsel %vm699, -1e+10, %v1475
        %v1481 = vsel %vm700, -1e+10, %v1478
        %v1482 = vsel %vm703, %v1480, -inf
        %1483 = vmax.xlane.f32.xlu0 %v1482
        %v1484 = vpop.xlane.xlu0 %1483
        %v1485 = vsel %vm703, %v1481, -inf
        %1486 = vmax.xlane.f32.xlu0 %v1485
        %v1487 = vpop.xlane.xlu0 %1486
        %v1488 = vsub.f32 %v1480, %v1484
        %v1489 = vsub.f32 %v1481, %v1487
        %v1490 = vmul.f32 %v1488, 1.442695
        %v1491 = vpow.pop %v1490
        %v1492 = vmul.f32 %v1489, 1.442695
        %v1493 = vpow.pop %v1492
        %v1494 = vsel %vm703, %v1491, 0.0
        %1495 = vadd.xlane.f32.xlu0 %v1494
        %v1496 = vpop.xlane.xlu0 %1495
        %v1497 = vsel %vm703, %v1493, 0.0
        %1498 = vadd.xlane.f32.xlu0 %v1497
        %v1499 = vpop.xlane.xlu0 %1498
        %v1500 = vrcp.pop %v1496
        %v1501 = vrcp.pop %v1499
        %v1502 = vmul.f32 %v1491, %v1500
        %v1503 = vmul.f32 %v1493, %v1501
        %v1505 = vsel %vm703, %v1502, 0
        %v1508 = vsel %vm703, %v1503, 0
        %1510 = vmatpush.msra.mxu0 0.0
        %1511 = vmatpush.msra.mxu0 0.0
        %1512 = vmatpush.msra.mxu0 0.0
        %1513 = vmatpush.msra.mxu0 0.0
        %1514 = vmatpush.msra.mxu0 0.0
        %1515 = vmatpush.msra.mxu0 0.0
        %1516 = vmatpush.msra.mxu0 0.0
        %1517 = vmatpush.msra.mxu0 0.0
        %1518 = vmatpush.msra.mxu0 0.0
        %1519 = vmatpush.msra.mxu0 0.0
        %1520 = vmatpush.msra.mxu0 0.0
        %1521 = vmatpush.msra.mxu0 0.0
        %1522 = vmatpush.msra.mxu0 0.0
        %1523 = vmatpush.msra.mxu0 0.0
        %1524 = vmatpush.msra.mxu0 %v1443
        %1525 = vmatpush.msra.mxu0 %v1440
        %1526 = vmatmul.f32.gmra.mxu0 %v1505
        %v1527 = vpop.f32.mrf.mxu0
        %v1528 = vadd.f32 0.0, %v1527
        %1529 = vmatmul.f32.gmra.mxu0 %v1508
        %v1530 = vpop.f32.mrf.mxu0
        %v1531 = vadd.f32 0.0, %v1530
        %1532 = vdwg.mxu0
        %s1533 = scalar_lea.vmem %s9, 96
        %v1534 = vld [vmem:[%s1533] sm:$0xff]
        %v1535 = vld [vmem:[%s1533 + $0x8] sm:$0xff]
        %v1536 = vld [vmem:[%s1533 + $0x10] sm:$0xff]
        %v1537 = vld [vmem:[%s1533 + $0x18] sm:$0xff]
        %v1539 = vsel %vm663, %v1528, 0
        %v1542 = vsel %vm663, %v1531, 0
        %1544 = vmatpush.msra.mxu0 0.0
        %1545 = vmatpush.msra.mxu0 0.0
        %1546 = vmatpush.msra.mxu0 0.0
        %1547 = vmatpush.msra.mxu0 0.0
        %1548 = vmatpush.msra.mxu0 0.0
        %1549 = vmatpush.msra.mxu0 0.0
        %1550 = vmatpush.msra.mxu0 0.0
        %1551 = vmatpush.msra.mxu0 0.0
        %1552 = vmatpush.msra.mxu0 0.0
        %1553 = vmatpush.msra.mxu0 0.0
        %1554 = vmatpush.msra.mxu0 0.0
        %1555 = vmatpush.msra.mxu0 0.0
        %1556 = vmatpush.msra.mxu0 %v1537
        %1557 = vmatpush.msra.mxu0 %v1536
        %1558 = vmatpush.msra.mxu0 %v1535
        %1559 = vmatpush.msra.mxu0 %v1534
        %1560 = vmatmul.f32.gmra.mxu0 %v1539
        %v1561 = vpop.f32.mrf.mxu0
        %v1562 = vadd.f32 0.0, %v1561
        %1563 = vmatmul.f32.gmra.mxu0 %v1542
        %v1564 = vpop.f32.mrf.mxu0
        %v1565 = vadd.f32 0.0, %v1564
        %1566 = vdwg.mxu0
        %v1567 = vadd.f32 %v1306, %v1562
        %v1568 = vadd.f32 %v1307, %v1565
        %v1569 = vld [vmem:[%s10] sm:$0x1]
        %v1571 = vperm.slane %v1569, 0
        %v1573 = vadd.f32 %v1567, %v1571
        %v1574 = vadd.f32 %v1568, %v1571
        %v1575 = vadd.f32 %v526, %v1573
        %v1576 = vadd.f32 %v527, %v1574
        %v1577 = vld [vmem:[%s11] sm:$0x1]
        %v1578 = vld [vmem:[%s12] sm:$0x1]
        %1579 = vadd.xlane.f32.xlu0 %v1575
        %v1580 = vpop.xlane.xlu0 %1579
        %1581 = vadd.xlane.f32.xlu0 %v1576
        %v1582 = vpop.xlane.xlu0 %1581
        %v1583 = vrcp.pop 128.0
        %v1584 = vmul.f32 128.0, %v1583
        %v1585 = vsub.f32 1.0, %v1584
        %v1586 = vmul.f32 %v1583, %v1585
        %v1587 = vadd.f32 %v1583, %v1586
        %vm1588 = vweird.f32 %v1583
        %v1589 = vsel %vm1588, %v1583, %v1587
        %v1590 = vmul.f32 %v1580, %v1589
        %v1591 = vmul.f32 %v1582, %v1589
        %v1592 = vsub.f32 %v1575, %v1590
        %v1593 = vsub.f32 %v1576, %v1591
        %v1594 = vmul.f32 %v1592, %v1592
        %v1595 = vmul.f32 %v1593, %v1593
        %1596 = vadd.xlane.f32.xlu0 %v1594
        %v1597 = vpop.xlane.xlu0 %1596
        %1598 = vadd.xlane.f32.xlu0 %v1595
        %v1599 = vpop.xlane.xlu0 %1598
        %v1600 = vmul.f32 %v1597, %v1589
        %v1601 = vmul.f32 %v1599, %v1589
        %v1602 = vadd.f32 %v1600, 1e-05
        %v1603 = vadd.f32 %v1601, 1e-05
        %v1604 = vrsqrt.pop %v1602
        %v1605 = vmul.f32 %v1604, %v1602
        %v1606 = vmul.f32 %v1605, %v1604
        %v1607 = vmul.f32 0.5, %v1606
        %v1608 = vsub.f32 1.5, %v1607
        %v1609 = vmul.f32 %v1604, %v1608
        %vm1610 = vweird.f32 %v1602
        %vm1611 = vweird.f32 %v1604
        %vm1612 = vmor %vm1610, %vm1611
        %v1613 = vsel %vm1612, %v1604, %v1609
        %v1614 = vrsqrt.pop %v1603
        %v1615 = vmul.f32 %v1614, %v1603
        %v1616 = vmul.f32 %v1615, %v1614
        %v1617 = vmul.f32 0.5, %v1616
        %v1618 = vsub.f32 1.5, %v1617
        %v1619 = vmul.f32 %v1614, %v1618
        %vm1620 = vweird.f32 %v1603
        %vm1621 = vweird.f32 %v1614
        %vm1622 = vmor %vm1620, %vm1621
        %v1623 = vsel %vm1622, %v1614, %v1619
        %v1624 = vmul.f32 %v1592, %v1613
        %v1625 = vmul.f32 %v1593, %v1623
        %v1627 = vperm.slane %v1577, 0
        %v1629 = vmul.f32 %v1624, %v1627
        %v1630 = vmul.f32 %v1625, %v1627
        %v1632 = vperm.slane %v1578, 0
        %v1634 = vadd.f32 %v1629, %v1632
        %v1635 = vadd.f32 %v1630, %v1632
        %1636 = vst [vmem:[%s499] sm:$0xff] %v1634
        %1637 = vst [vmem:[%s499 + $0x8] sm:$0xff] %v1635
        %s1638 = sand.u32 %s341, 1
        %s1639 = scalar_lea.sflag [#allocation3], %s1638
        %s1640 = sand.u32 %s341, 1
        %s1641 = smul.addr %s1640, 16
        %s1642 = scalar_lea.vmem [#allocation2], %s1641
        // Predicated region
        $region73: #{tpu_custom_call.1} parent=71 // pred_check
          %p1643 = pneg %p351
        $region74: #{tpu_custom_call.1} parent=71 // pred_check_branch
          %1645 = sbr.rel (%p1643) target = $region76
        $region75: #{tpu_custom_call.1} parent=71 // pred_region
          %s1646 = smul.u32 2, %s32
          %1648 = vsyncadd %s1639, 0
          %s1649 = smul.addr %s31, 2
          %s1650 = sadd.s32 %s1646, %s1649
          %s1651 = smul.addr %s1650, 8
          %s1652 = scalar_lea.hbm %s13, %s1651
          %s1653 = sshll.u32 %s1642, 4
          %s1654 = int_to_ptr.vmem [resolvable:$true] %s1653
          %s1655 = sshll.u32 %s1652, 4
          %s1656 = int_to_ptr.hbm [resolvable:$true] %s1655
          %1661 = dma.vmem_to_hbm [thread:$0]  %s1654, 256, %s1656, %s1639, 128, 128, 8
        $region76: #{tpu_custom_call.1} parent=71 // pred_fallthru
          _
      $region72: #{tpu_custom_call.1} parent=5 // pred_fallthru
        _
      %p1662 = scmp.le.s32.totalorder 2, %s22
      // Predicated region
      $region77: #{tpu_custom_call.1} parent=5 // pred_check
        %p1663 = pneg %p1662
      $region78: #{tpu_custom_call.1} parent=5 // pred_check_branch
        %1665 = sbr.rel (%p1663) target = $region80
      $region79: #{tpu_custom_call.1} parent=5 // pred_region
        %s1666 = ssub.s32 %s22, 2
        // Predicated region
        $region81: #{tpu_custom_call.1} parent=79 // pred_check
          %p1667 = pneg %p357
        $region82: #{tpu_custom_call.1} parent=79 // pred_check_branch
          %1669 = sbr.rel (%p1667) target = $region84
        $region83: #{tpu_custom_call.1} parent=79 // pred_region
          %s1670 = sand.u32 %s342, 1
          %s1671 = scalar_lea.sflag [#allocation3], %s1670
          %s1672 = sand.u32 %s342, 1
          %s1673 = smul.addr %s1672, 16
          %s1674 = scalar_lea.vmem [#allocation2], %s1673
          %1676 = dma.done %s1671, 256
        $region84: #{tpu_custom_call.1} parent=79 // pred_fallthru
          _
      $region80: #{tpu_custom_call.1} parent=5 // pred_fallthru
        _
    $region6: #{tpu_custom_call.1} parent=1 // loop_footer
      %s26 = sadd.s32 1, %s22
    $region7: #{tpu_custom_call.1} parent=1 // loop_footer_branch
      %21 = sbr.rel target = $region3
    $region8: #{tpu_custom_call.1} parent=1 // loop_exit
      _
    %1677 = vsyncpa [#allocation3], 1
    %s1678 = scalar_lea.sflag [#allocation3], 1
    %1679 = vsyncpa %s1678, 1

</llo_original>
